<compile_context>
chip_gen: v7x
topology: tpu7x:2x2x1
jax: 0.10.0
libtpu: 0.0.40
codegen_flags: <defaults>
</compile_context>

<pallas_src>
import functools

import jax
import jax.numpy as jnp
import numpy as np
from jax.experimental import pallas as pl
from jax.experimental.pallas import tpu as pltpu


# ------------------------------- kernel --------------------------------------
def _decoder_kernel(x_ref, t1_ref, b1_ref, t2_ref, b2_ref, d_ref, bd_ref,
                    o_ref, xpad_ref, h1pad_ref, *, H, W, Cin, Cmid, Cout, Cd):
    f32 = jnp.float32

    # ---- vertical zero halo for the input (horizontal pad folded into T1) ---
    xpad_ref[0:1, :] = jnp.zeros((1, W * Cin), f32)
    xpad_ref[H + 1:H + 2, :] = jnp.zeros((1, W * Cin), f32)
    xpad_ref[1:H + 1, :] = x_ref[0]

    # ---- Conv1 (3x3, pad=1) + folded BN1 + ReLU: 3 banded matmuls -----------
    h1 = jnp.maximum(
        jnp.dot(xpad_ref[0:H, :], t1_ref[0], preferred_element_type=f32)
        + jnp.dot(xpad_ref[1:H + 1, :], t1_ref[1], preferred_element_type=f32)
        + jnp.dot(xpad_ref[2:H + 2, :], t1_ref[2], preferred_element_type=f32)
        + b1_ref[...],
        0.0)                                            # (H, W*Cmid) = (16,128)

    # ---- vertical zero halo for h1 (only 2 halo rows; h1 stays lane-dense) --
    h1pad_ref[0:1, :] = jnp.zeros((1, W * Cmid), f32)
    h1pad_ref[H + 1:H + 2, :] = jnp.zeros((1, W * Cmid), f32)
    h1pad_ref[1:H + 1, :] = h1

    # ---- Conv2 (3x3, pad=1) + folded BN2 + ReLU: 3 banded matmuls -----------
    h2 = jnp.maximum(
        jnp.dot(h1pad_ref[0:H, :], t2_ref[0], preferred_element_type=f32)
        + jnp.dot(h1pad_ref[1:H + 1, :], t2_ref[1], preferred_element_type=f32)
        + jnp.dot(h1pad_ref[2:H + 2, :], t2_ref[2], preferred_element_type=f32)
        + b2_ref[...],
        0.0)                                            # (H, W*Cout) = (16,128)

    # ---- ConvTranspose2d (k=2, s=2): block-diagonal matmuls, even/odd rows --
    y_even = jnp.dot(h2, d_ref[0], preferred_element_type=f32) + bd_ref[...]
    y_odd = jnp.dot(h2, d_ref[1], preferred_element_type=f32) + bd_ref[...]
    # Row interleave: (16, 256) -> (32, 128); row 2i = y_even[i], 2i+1 = y_odd[i].
    y = jnp.concatenate([y_even, y_odd], axis=1).reshape(2 * H, 2 * W * Cd)
    o_ref[...] = y.reshape(1, 2 * H, 2 * W * Cd)        # lane-dense (32, 128)


# ------------------------------- wrapper --------------------------------------
def decoder2d_pallas(x_nhwc, t1, b1_row, t2, b2_row, d_mat, bd_row,
                     *, Cin, Cmid, Cout, Cd):
    N, H, W, _ = x_nhwc.shape
    x2d = x_nhwc.reshape(N, H, W * Cin)          # contiguous, free reshape

    kernel = functools.partial(_decoder_kernel, H=H, W=W, Cin=Cin, Cmid=Cmid,
                               Cout=Cout, Cd=Cd)

    out = pl.pallas_call(
        kernel,
        out_shape=jax.ShapeDtypeStruct((N, 2 * H, 2 * W * Cd), jnp.float32),
        grid=(N,),
        in_specs=[
            pl.BlockSpec((1, H, W * Cin), lambda n: (n, 0, 0)),
            pl.BlockSpec((3, W * Cin, W * Cmid), lambda n: (0, 0, 0)),
            pl.BlockSpec((1, W * Cmid), lambda n: (0, 0)),
            pl.BlockSpec((3, W * Cmid, W * Cout), lambda n: (0, 0, 0)),
            pl.BlockSpec((1, W * Cout), lambda n: (0, 0)),
            pl.BlockSpec((2, W * Cout, 2 * W * Cd), lambda n: (0, 0, 0)),
            pl.BlockSpec((1, 2 * W * Cd), lambda n: (0, 0)),
        ],
        out_specs=pl.BlockSpec((1, 2 * H, 2 * W * Cd), lambda n: (n, 0, 0)),
        scratch_shapes=[
            pltpu.VMEM((H + 2, W * Cin), jnp.float32),    # vertically padded x
            pltpu.VMEM((H + 2, W * Cmid), jnp.float32),   # vertically padded h1
        ],
        compiler_params=pltpu.CompilerParams(
            dimension_semantics=("parallel",)),
    )(x2d, t1, b1_row, t2, b2_row, d_mat, bd_row)

    # (N, 2H, 2W*Cd) -> (N, 2H, 2W, Cd): trivial reshape, no data movement.
    return out.reshape(N, 2 * H, 2 * W, Cd)


# -------------------------- weight precompute ---------------------------------
def _banded_conv_weight(w_eff, W):
    """w_eff: (Co, Ci, 3, 3) OIHW -> (3, W*Ci, W*Co) banded (dx + horiz pad folded)."""
    Co, Ci = w_eff.shape[0], w_eff.shape[1]
    # sel[dx, jin, jout] = 1 iff jin == jout + dx - 1 (out-of-range -> zero pad)
    sel = np.zeros((3, W, W), np.float32)
    for dx in range(3):
        for jout in range(W):
            jin = jout + dx - 1
            if 0 <= jin < W:
                sel[dx, jin, jout] = 1.0
    w_hw = jnp.transpose(w_eff, (2, 3, 1, 0))            # (dy, dx, Ci, Co)
    # T[dy, jin, ci, jout, co] = sum_dx sel[dx, jin, jout] * w_hw[dy, dx, ci, co]
    t = jnp.einsum("xab,yxio->yaibo", jnp.asarray(sel), w_hw)
    return t.reshape(3, W * Ci, W * Co)


def _blockdiag_deconv_weight(wd, W):
    """wd: (Ci, Cd, 2, 2) ConvTranspose IOHW -> (2, W*Ci, 2*W*Cd) block-diagonal."""
    Ci, Cd = wd.shape[0], wd.shape[1]
    eye = jnp.eye(W, dtype=wd.dtype)
    wd_p = jnp.transpose(wd, (2, 0, 3, 1))               # (dy, ci, dx, co)
    # D[dy, j, ci, j', dx, co] = delta(j, j') * wd[ci, co, dy, dx]
    d = jnp.einsum("jk,ycxo->yjckxo", eye, wd_p)
    return d.reshape(2, W * Ci, 2 * W * Cd)


def fold_and_band(p, W, eps=1e-5):
    # Fold eval-mode BN into the preceding conv, then build banded matrices.
    s1 = p["bn1_gamma"] / jnp.sqrt(p["bn1_var"] + eps)
    s2 = p["bn2_gamma"] / jnp.sqrt(p["bn2_var"] + eps)
    w1_eff = p["w1"] * s1[:, None, None, None]           # (Cmid, Cin, 3, 3)
    b1_eff = (p["b1"] - p["bn1_mean"]) * s1 + p["bn1_beta"]
    w2_eff = p["w2"] * s2[:, None, None, None]           # (Cout, Cmid, 3, 3)
    b2_eff = (p["b2"] - p["bn2_mean"]) * s2 + p["bn2_beta"]

    Cmid = w1_eff.shape[0]
    Cout = w2_eff.shape[0]
    Cd = p["wd"].shape[1]

    t1 = _banded_conv_weight(w1_eff, W)                  # (3, W*Cin,  W*Cmid)
    t2 = _banded_conv_weight(w2_eff, W)                  # (3, W*Cmid, W*Cout)
    d_mat = _blockdiag_deconv_weight(p["wd"], W)         # (2, W*Cout, 2*W*Cd)

    b1_row = jnp.tile(b1_eff, W).reshape(1, W * Cmid)
    b2_row = jnp.tile(b2_eff, W).reshape(1, W * Cout)
    bd_row = jnp.tile(p["bd"], 2 * W).reshape(1, 2 * W * Cd)
    return t1, b1_row, t2, b2_row, d_mat, bd_row


# ----------------------------- parameter setup --------------------------------
def make_params(key, Cin, Cmid, Cout, Cd):
    ks = jax.random.split(key, 14)
    p = {}
    # Conv weights in PyTorch OIHW layout, ConvTranspose in IOHW.
    p["w1"] = 0.1 * jax.random.normal(ks[0], (Cmid, Cin, 3, 3), jnp.float32)
    p["b1"] = 0.1 * jax.random.normal(ks[1], (Cmid,), jnp.float32)
    p["w2"] = 0.1 * jax.random.normal(ks[2], (Cout, Cmid, 3, 3), jnp.float32)
    p["b2"] = 0.1 * jax.random.normal(ks[3], (Cout,), jnp.float32)
    p["wd"] = 0.1 * jax.random.normal(ks[4], (Cout, Cd, 2, 2), jnp.float32)
    p["bd"] = 0.1 * jax.random.normal(ks[5], (Cd,), jnp.float32)
    # BatchNorm (eval-mode) parameters.
    p["bn1_gamma"] = 1.0 + 0.1 * jax.random.normal(ks[6], (Cmid,), jnp.float32)
    p["bn1_beta"] = 0.1 * jax.random.normal(ks[7], (Cmid,), jnp.float32)
    p["bn1_mean"] = 0.1 * jax.random.normal(ks[8], (Cmid,), jnp.float32)
    p["bn1_var"] = jax.random.uniform(ks[9], (Cmid,), jnp.float32, 0.5, 1.5)
    p["bn2_gamma"] = 1.0 + 0.1 * jax.random.normal(ks[10], (Cout,), jnp.float32)
    p["bn2_beta"] = 0.1 * jax.random.normal(ks[11], (Cout,), jnp.float32)
    p["bn2_mean"] = 0.1 * jax.random.normal(ks[12], (Cout,), jnp.float32)
    p["bn2_var"] = jax.random.uniform(ks[13], (Cout,), jnp.float32, 0.5, 1.5)
    return p


# ------------------------------ pure-JAX reference -----------------------------
def ref_forward(x_nhwc, p, eps=1e-5):
    def conv3(x, w, b):
        y = jax.lax.conv_general_dilated(
            x, w, window_strides=(1, 1), padding=((1, 1), (1, 1)),
            dimension_numbers=("NHWC", "OIHW", "NHWC"))
        return y + b[None, None, None, :]

    def bn(x, gamma, beta, mean, var):
        return (x - mean) / jnp.sqrt(var + eps) * gamma + beta

    h = jnp.maximum(bn(conv3(x_nhwc, p["w1"], p["b1"]),
                       p["bn1_gamma"], p["bn1_beta"], p["bn1_mean"], p["bn1_var"]), 0.0)
    h = jnp.maximum(bn(conv3(h, p["w2"], p["b2"]),
                       p["bn2_gamma"], p["bn2_beta"], p["bn2_mean"], p["bn2_var"]), 0.0)
    # ConvTranspose2d k=2 s=2: out[n,2i+dy,2j+dx,co] = sum_ci h[n,i,j,ci]*wd[ci,co,dy,dx]+bd
    N, H, W, _ = h.shape
    Cd = p["wd"].shape[1]
    y = jnp.einsum("nhwc,cokl->nhkwlo", h, p["wd"])
    y = y.reshape(N, 2 * H, 2 * W, Cd) + p["bd"][None, None, None, :]
    return y


if __name__ == "__main__":
    # Module config: Decoder2D(in_channels=4, middle_channels=8, out_channels=8,
    #                          deconv_channels=4, dropout=False)
    N, Cin, Cmid, Cout, Cd, H, W = 2, 4, 8, 8, 4, 16, 16

    key = jax.random.PRNGKey(0)
    k_x, k_p = jax.random.split(key)
    # PyTorch-style NCHW input, transposed to NHWC for the kernel.
    x_nchw = jax.random.normal(k_x, (N, Cin, H, W), jnp.float32)
    x_nhwc = jnp.transpose(x_nchw, (0, 2, 3, 1))

    params = make_params(k_p, Cin, Cmid, Cout, Cd)
    t1, b1_row, t2, b2_row, d_mat, bd_row = fold_and_band(params, W)

    out = decoder2d_pallas(x_nhwc, t1, b1_row, t2, b2_row, d_mat, bd_row,
                           Cin=Cin, Cmid=Cmid, Cout=Cout, Cd=Cd)
    out = jax.block_until_ready(out)

    ref = jax.block_until_ready(ref_forward(x_nhwc, params))
    np.testing.assert_allclose(np.asarray(out), np.asarray(ref),
                               rtol=1e-4, atol=1e-4)
    assert out.shape == (N, 2 * H, 2 * W, Cd)
    print("KERNEL_OK")
</pallas_src>

<mosaic_0001>
module attributes {stable_mosaic.version = 11 : i64} {
  func.func @_decoder_kernel(%arg0: i32, %arg1: memref<1x16x64xf32, #tpu.memory_space<vmem>>, %arg2: memref<3x64x128xf32, #tpu.memory_space<vmem>>, %arg3: memref<1x128xf32, #tpu.memory_space<vmem>>, %arg4: memref<3x128x128xf32, #tpu.memory_space<vmem>>, %arg5: memref<1x128xf32, #tpu.memory_space<vmem>>, %arg6: memref<2x128x128xf32, #tpu.memory_space<vmem>>, %arg7: memref<1x128xf32, #tpu.memory_space<vmem>>, %arg8: memref<1x32x128xf32, #tpu.memory_space<vmem>>, %arg9: memref<18x64xf32, #tpu.memory_space<vmem>>, %arg10: memref<18x128xf32, #tpu.memory_space<vmem>>) attributes {dimension_semantics = [#tpu.dimension_semantics<parallel>], iteration_bounds = array<i64: 2>, scalar_prefetch = 0 : i64, scratch_operands = 2 : i64, tpu.core_type = #tpu.core_type<tc>, window_params = [{transform_indices = @transform_0, window_bounds = array<i64: 1, 16, 64>}, {pipeline_mode = #tpu.pipeline_mode<synchronous>, transform_indices = @transform_1, window_bounds = array<i64: 3, 64, 128>}, {pipeline_mode = #tpu.pipeline_mode<synchronous>, transform_indices = @transform_2, window_bounds = array<i64: 1, 128>}, {pipeline_mode = #tpu.pipeline_mode<synchronous>, transform_indices = @transform_3, window_bounds = array<i64: 3, 128, 128>}, {pipeline_mode = #tpu.pipeline_mode<synchronous>, transform_indices = @transform_4, window_bounds = array<i64: 1, 128>}, {pipeline_mode = #tpu.pipeline_mode<synchronous>, transform_indices = @transform_5, window_bounds = array<i64: 2, 128, 128>}, {pipeline_mode = #tpu.pipeline_mode<synchronous>, transform_indices = @transform_6, window_bounds = array<i64: 1, 128>}, {transform_indices = @transform_7, window_bounds = array<i64: 1, 32, 128>}]} {
    %cst = arith.constant 0.000000e+00 : f32
    %0 = vector.broadcast %cst : f32 to vector<1x64xf32>
    %c0 = arith.constant 0 : index
    %c0_0 = arith.constant 0 : index
    %1 = vector.load %arg9[%c0, %c0_0] : memref<18x64xf32, #tpu.memory_space<vmem>>, vector<1x64xf32>
    tpu.vector_store %arg9[%c0, %c0_0], %0 {strides = array<i32>} : memref<18x64xf32, #tpu.memory_space<vmem>>, vector<1x64xf32>,
    %cst_1 = arith.constant 0.000000e+00 : f32
    %2 = vector.broadcast %cst_1 : f32 to vector<1x64xf32>
    %c17 = arith.constant 17 : index
    %c0_2 = arith.constant 0 : index
    %3 = vector.load %arg9[%c17, %c0_2] : memref<18x64xf32, #tpu.memory_space<vmem>>, vector<1x64xf32>
    tpu.vector_store %arg9[%c17, %c0_2], %2 {strides = array<i32>} : memref<18x64xf32, #tpu.memory_space<vmem>>, vector<1x64xf32>,
    %c0_3 = arith.constant 0 : index
    %c0_4 = arith.constant 0 : index
    %c0_5 = arith.constant 0 : index
    %4 = vector.load %arg1[%c0_3, %c0_4, %c0_5] : memref<1x16x64xf32, #tpu.memory_space<vmem>>, vector<1x16x64xf32>
    %5 = vector.shape_cast %4 : vector<1x16x64xf32> to vector<16x64xf32>
    %c1 = arith.constant 1 : index
    %c0_6 = arith.constant 0 : index
    %6 = vector.load %arg9[%c1, %c0_6] : memref<18x64xf32, #tpu.memory_space<vmem>>, vector<16x64xf32>
    tpu.vector_store %arg9[%c1, %c0_6], %5 {strides = array<i32>} : memref<18x64xf32, #tpu.memory_space<vmem>>, vector<16x64xf32>,
    %c0_7 = arith.constant 0 : index
    %c0_8 = arith.constant 0 : index
    %7 = vector.load %arg9[%c0_7, %c0_8] : memref<18x64xf32, #tpu.memory_space<vmem>>, vector<16x64xf32>
    %c0_9 = arith.constant 0 : index
    %c0_10 = arith.constant 0 : index
    %c0_11 = arith.constant 0 : index
    %8 = vector.load %arg2[%c0_9, %c0_10, %c0_11] : memref<3x64x128xf32, #tpu.memory_space<vmem>>, vector<1x64x128xf32>
    %9 = vector.shape_cast %8 : vector<1x64x128xf32> to vector<64x128xf32>
    %cst_12 = arith.constant dense<0.000000e+00> : vector<16x128xf32>
    %10 = tpu.matmul %7, %9, %cst_12 {dimension_numbers = #tpu.dot_dimension_numbers<[1], [0], [0], [1], [0, 0, 1, 1], [], []>} : vector<16x64xf32>, vector<64x128xf32>, vector<16x128xf32> -> vector<16x128xf32>
    %c1_13 = arith.constant 1 : index
    %c0_14 = arith.constant 0 : index
    %11 = vector.load %arg9[%c1_13, %c0_14] : memref<18x64xf32, #tpu.memory_space<vmem>>, vector<16x64xf32>
    %c1_15 = arith.constant 1 : index
    %c0_16 = arith.constant 0 : index
    %c0_17 = arith.constant 0 : index
    %12 = vector.load %arg2[%c1_15, %c0_16, %c0_17] : memref<3x64x128xf32, #tpu.memory_space<vmem>>, vector<1x64x128xf32>
    %13 = vector.shape_cast %12 : vector<1x64x128xf32> to vector<64x128xf32>
    %cst_18 = arith.constant dense<0.000000e+00> : vector<16x128xf32>
    %14 = tpu.matmul %11, %13, %cst_18 {dimension_numbers = #tpu.dot_dimension_numbers<[1], [0], [0], [1], [0, 0, 1, 1], [], []>} : vector<16x64xf32>, vector<64x128xf32>, vector<16x128xf32> -> vector<16x128xf32>
    %15 = arith.addf %10, %14 : vector<16x128xf32>
    %c2 = arith.constant 2 : index
    %c0_19 = arith.constant 0 : index
    %16 = vector.load %arg9[%c2, %c0_19] : memref<18x64xf32, #tpu.memory_space<vmem>>, vector<16x64xf32>
    %c2_20 = arith.constant 2 : index
    %c0_21 = arith.constant 0 : index
    %c0_22 = arith.constant 0 : index
    %17 = vector.load %arg2[%c2_20, %c0_21, %c0_22] : memref<3x64x128xf32, #tpu.memory_space<vmem>>, vector<1x64x128xf32>
    %18 = vector.shape_cast %17 : vector<1x64x128xf32> to vector<64x128xf32>
    %cst_23 = arith.constant dense<0.000000e+00> : vector<16x128xf32>
    %19 = tpu.matmul %16, %18, %cst_23 {dimension_numbers = #tpu.dot_dimension_numbers<[1], [0], [0], [1], [0, 0, 1, 1], [], []>} : vector<16x64xf32>, vector<64x128xf32>, vector<16x128xf32> -> vector<16x128xf32>
    %20 = arith.addf %15, %19 : vector<16x128xf32>
    %c0_24 = arith.constant 0 : index
    %c0_25 = arith.constant 0 : index
    %21 = vector.load %arg3[%c0_24, %c0_25] : memref<1x128xf32, #tpu.memory_space<vmem>>, vector<1x128xf32>
    %22 = vector.broadcast %21 : vector<1x128xf32> to vector<16x128xf32>
    %23 = arith.addf %20, %22 : vector<16x128xf32>
    %cst_26 = arith.constant 0.000000e+00 : f32
    %24 = vector.broadcast %cst_26 : f32 to vector<16x128xf32>
    %25 = arith.maximumf %23, %24 : vector<16x128xf32>
    %cst_27 = arith.constant 0.000000e+00 : f32
    %26 = vector.broadcast %cst_27 : f32 to vector<1x128xf32>
    %c0_28 = arith.constant 0 : index
    %c0_29 = arith.constant 0 : index
    %27 = vector.load %arg10[%c0_28, %c0_29] : memref<18x128xf32, #tpu.memory_space<vmem>>, vector<1x128xf32>
    tpu.vector_store %arg10[%c0_28, %c0_29], %26 {strides = array<i32>} : memref<18x128xf32, #tpu.memory_space<vmem>>, vector<1x128xf32>,
    %cst_30 = arith.constant 0.000000e+00 : f32
    %28 = vector.broadcast %cst_30 : f32 to vector<1x128xf32>
    %c17_31 = arith.constant 17 : index
    %c0_32 = arith.constant 0 : index
    %29 = vector.load %arg10[%c17_31, %c0_32] : memref<18x128xf32, #tpu.memory_space<vmem>>, vector<1x128xf32>
    tpu.vector_store %arg10[%c17_31, %c0_32], %28 {strides = array<i32>} : memref<18x128xf32, #tpu.memory_space<vmem>>, vector<1x128xf32>,
    %c1_33 = arith.constant 1 : index
    %c0_34 = arith.constant 0 : index
    %30 = vector.load %arg10[%c1_33, %c0_34] : memref<18x128xf32, #tpu.memory_space<vmem>>, vector<16x128xf32>
    tpu.vector_store %arg10[%c1_33, %c0_34], %25 {strides = array<i32>} : memref<18x128xf32, #tpu.memory_space<vmem>>, vector<16x128xf32>,
    %c0_35 = arith.constant 0 : index
    %c0_36 = arith.constant 0 : index
    %31 = vector.load %arg10[%c0_35, %c0_36] : memref<18x128xf32, #tpu.memory_space<vmem>>, vector<16x128xf32>
    %c0_37 = arith.constant 0 : index
    %c0_38 = arith.constant 0 : index
    %c0_39 = arith.constant 0 : index
    %32 = vector.load %arg4[%c0_37, %c0_38, %c0_39] : memref<3x128x128xf32, #tpu.memory_space<vmem>>, vector<1x128x128xf32>
    %33 = vector.shape_cast %32 : vector<1x128x128xf32> to vector<128x128xf32>
    %cst_40 = arith.constant dense<0.000000e+00> : vector<16x128xf32>
    %34 = tpu.matmul %31, %33, %cst_40 {dimension_numbers = #tpu.dot_dimension_numbers<[1], [0], [0], [1], [0, 0, 1, 1], [], []>} : vector<16x128xf32>, vector<128x128xf32>, vector<16x128xf32> -> vector<16x128xf32>
    %c1_41 = arith.constant 1 : index
    %c0_42 = arith.constant 0 : index
    %35 = vector.load %arg10[%c1_41, %c0_42] : memref<18x128xf32, #tpu.memory_space<vmem>>, vector<16x128xf32>
    %c1_43 = arith.constant 1 : index
    %c0_44 = arith.constant 0 : index
    %c0_45 = arith.constant 0 : index
    %36 = vector.load %arg4[%c1_43, %c0_44, %c0_45] : memref<3x128x128xf32, #tpu.memory_space<vmem>>, vector<1x128x128xf32>
    %37 = vector.shape_cast %36 : vector<1x128x128xf32> to vector<128x128xf32>
    %cst_46 = arith.constant dense<0.000000e+00> : vector<16x128xf32>
    %38 = tpu.matmul %35, %37, %cst_46 {dimension_numbers = #tpu.dot_dimension_numbers<[1], [0], [0], [1], [0, 0, 1, 1], [], []>} : vector<16x128xf32>, vector<128x128xf32>, vector<16x128xf32> -> vector<16x128xf32>
    %39 = arith.addf %34, %38 : vector<16x128xf32>
    %c2_47 = arith.constant 2 : index
    %c0_48 = arith.constant 0 : index
    %40 = vector.load %arg10[%c2_47, %c0_48] : memref<18x128xf32, #tpu.memory_space<vmem>>, vector<16x128xf32>
    %c2_49 = arith.constant 2 : index
    %c0_50 = arith.constant 0 : index
    %c0_51 = arith.constant 0 : index
    %41 = vector.load %arg4[%c2_49, %c0_50, %c0_51] : memref<3x128x128xf32, #tpu.memory_space<vmem>>, vector<1x128x128xf32>
    %42 = vector.shape_cast %41 : vector<1x128x128xf32> to vector<128x128xf32>
    %cst_52 = arith.constant dense<0.000000e+00> : vector<16x128xf32>
    %43 = tpu.matmul %40, %42, %cst_52 {dimension_numbers = #tpu.dot_dimension_numbers<[1], [0], [0], [1], [0, 0, 1, 1], [], []>} : vector<16x128xf32>, vector<128x128xf32>, vector<16x128xf32> -> vector<16x128xf32>
    %44 = arith.addf %39, %43 : vector<16x128xf32>
    %c0_53 = arith.constant 0 : index
    %c0_54 = arith.constant 0 : index
    %45 = vector.load %arg5[%c0_53, %c0_54] : memref<1x128xf32, #tpu.memory_space<vmem>>, vector<1x128xf32>
    %46 = vector.broadcast %45 : vector<1x128xf32> to vector<16x128xf32>
    %47 = arith.addf %44, %46 : vector<16x128xf32>
    %cst_55 = arith.constant 0.000000e+00 : f32
    %48 = vector.broadcast %cst_55 : f32 to vector<16x128xf32>
    %49 = arith.maximumf %47, %48 : vector<16x128xf32>
    %c0_56 = arith.constant 0 : index
    %c0_57 = arith.constant 0 : index
    %c0_58 = arith.constant 0 : index
    %50 = vector.load %arg6[%c0_56, %c0_57, %c0_58] : memref<2x128x128xf32, #tpu.memory_space<vmem>>, vector<1x128x128xf32>
    %51 = vector.shape_cast %50 : vector<1x128x128xf32> to vector<128x128xf32>
    %cst_59 = arith.constant dense<0.000000e+00> : vector<16x128xf32>
    %52 = tpu.matmul %49, %51, %cst_59 {dimension_numbers = #tpu.dot_dimension_numbers<[1], [0], [0], [1], [0, 0, 1, 1], [], []>} : vector<16x128xf32>, vector<128x128xf32>, vector<16x128xf32> -> vector<16x128xf32>
    %c0_60 = arith.constant 0 : index
    %c0_61 = arith.constant 0 : index
    %53 = vector.load %arg7[%c0_60, %c0_61] : memref<1x128xf32, #tpu.memory_space<vmem>>, vector<1x128xf32>
    %54 = vector.broadcast %53 : vector<1x128xf32> to vector<16x128xf32>
    %55 = arith.addf %52, %54 : vector<16x128xf32>
    %c1_62 = arith.constant 1 : index
    %c0_63 = arith.constant 0 : index
    %c0_64 = arith.constant 0 : index
    %56 = vector.load %arg6[%c1_62, %c0_63, %c0_64] : memref<2x128x128xf32, #tpu.memory_space<vmem>>, vector<1x128x128xf32>
    %57 = vector.shape_cast %56 : vector<1x128x128xf32> to vector<128x128xf32>
    %cst_65 = arith.constant dense<0.000000e+00> : vector<16x128xf32>
    %58 = tpu.matmul %49, %57, %cst_65 {dimension_numbers = #tpu.dot_dimension_numbers<[1], [0], [0], [1], [0, 0, 1, 1], [], []>} : vector<16x128xf32>, vector<128x128xf32>, vector<16x128xf32> -> vector<16x128xf32>
    %c0_66 = arith.constant 0 : index
    %c0_67 = arith.constant 0 : index
    %59 = vector.load %arg7[%c0_66, %c0_67] : memref<1x128xf32, #tpu.memory_space<vmem>>, vector<1x128xf32>
    %60 = vector.broadcast %59 : vector<1x128xf32> to vector<16x128xf32>
    %61 = arith.addf %58, %60 : vector<16x128xf32>
    %62 = tpu.concatenate %55, %61 in 1 : vector<16x128xf32>, vector<16x128xf32> -> vector<16x256xf32>
    %63 = vector.shape_cast %62 : vector<16x256xf32> to vector<32x128xf32>
    %64 = vector.shape_cast %63 : vector<32x128xf32> to vector<1x32x128xf32>
    %c0_68 = arith.constant 0 : index
    %c0_69 = arith.constant 0 : index
    %c0_70 = arith.constant 0 : index
    %65 = vector.load %arg8[%c0_68, %c0_69, %c0_70] : memref<1x32x128xf32, #tpu.memory_space<vmem>>, vector<1x32x128xf32>
    tpu.vector_store %arg8[%c0_68, %c0_69, %c0_70], %64 {strides = array<i32>} : memref<1x32x128xf32, #tpu.memory_space<vmem>>, vector<1x32x128xf32>,
    return
  }
  func.func @transform_0(%arg0: i32) -> (i32, i32, i32) {
    %c0_i32 = arith.constant 0 : i32
    %c0_i32_0 = arith.constant 0 : i32
    %c0_i32_1 = arith.constant 0 : i32
    return %arg0, %c0_i32, %c0_i32_0 : i32, i32, i32
  }
  func.func @transform_1(%arg0: i32) -> (i32, i32, i32) {
    %c0_i32 = arith.constant 0 : i32
    %c0_i32_0 = arith.constant 0 : i32
    %c0_i32_1 = arith.constant 0 : i32
    %c0_i32_2 = arith.constant 0 : i32
    return %c0_i32, %c0_i32_0, %c0_i32_1 : i32, i32, i32
  }
  func.func @transform_2(%arg0: i32) -> (i32, i32) {
    %c0_i32 = arith.constant 0 : i32
    %c0_i32_0 = arith.constant 0 : i32
    %c0_i32_1 = arith.constant 0 : i32
    return %c0_i32, %c0_i32_0 : i32, i32
  }
  func.func @transform_3(%arg0: i32) -> (i32, i32, i32) {
    %c0_i32 = arith.constant 0 : i32
    %c0_i32_0 = arith.constant 0 : i32
    %c0_i32_1 = arith.constant 0 : i32
    %c0_i32_2 = arith.constant 0 : i32
    return %c0_i32, %c0_i32_0, %c0_i32_1 : i32, i32, i32
  }
  func.func @transform_4(%arg0: i32) -> (i32, i32) {
    %c0_i32 = arith.constant 0 : i32
    %c0_i32_0 = arith.constant 0 : i32
    %c0_i32_1 = arith.constant 0 : i32
    return %c0_i32, %c0_i32_0 : i32, i32
  }
  func.func @transform_5(%arg0: i32) -> (i32, i32, i32) {
    %c0_i32 = arith.constant 0 : i32
    %c0_i32_0 = arith.constant 0 : i32
    %c0_i32_1 = arith.constant 0 : i32
    %c0_i32_2 = arith.constant 0 : i32
    return %c0_i32, %c0_i32_0, %c0_i32_1 : i32, i32, i32
  }
  func.func @transform_6(%arg0: i32) -> (i32, i32) {
    %c0_i32 = arith.constant 0 : i32
    %c0_i32_0 = arith.constant 0 : i32
    %c0_i32_1 = arith.constant 0 : i32
    return %c0_i32, %c0_i32_0 : i32, i32
  }
  func.func @transform_7(%arg0: i32) -> (i32, i32, i32) {
    %c0_i32 = arith.constant 0 : i32
    %c0_i32_0 = arith.constant 0 : i32
    %c0_i32_1 = arith.constant 0 : i32
    return %arg0, %c0_i32, %c0_i32_0 : i32, i32, i32
  }
}

</mosaic_0001>

<llo_original>
// kernel: tpu_custom_call.1
$region0: #{tpu_custom_call.1}
  #allocation0 [shape = 'u32[]', space=smem, size = 0x4, offset = 0x4, fixed_abs, tag = 'smem constant byte address 0x4 - core index']
  #allocation1 [shape = 'u32[144,128]{1,0:T(1,128)}', space=vmem, size = 0x12000, scoped, tag = 'internal scratch']
  #allocation2 [shape = 'f32[18,64]{1,0:T(8,128)}', space=vmem, size = 0x3000, scoped, tag = 'scratch operand']
  #allocation3 [shape = 'f32[18,128]{1,0:T(8,128)}', space=vmem, size = 0x3000, scoped, tag = 'scratch operand']
  %s0 = inlined_call_operand.hbm [shape: f32[2,16,64], index: 0, kind: input, shape index: {}]
  %s1 = inlined_call_operand.hbm [shape: f32[3,64,128], index: 1, kind: input, shape index: {}]
  %s2 = inlined_call_operand.vmem [shape: f32[1,128], index: 2, kind: input, shape index: {}]
  %s3 = inlined_call_operand.hbm [shape: f32[3,128,128], index: 3, kind: input, shape index: {}]
  %s4 = inlined_call_operand.vmem [shape: f32[1,128], index: 4, kind: input, shape index: {}]
  %s5 = inlined_call_operand.hbm [shape: f32[2,128,128], index: 5, kind: input, shape index: {}]
  %s6 = inlined_call_operand.vmem [shape: f32[1,128], index: 6, kind: input, shape index: {}]
  %s7 = inlined_call_operand.hbm [shape: f32[2,32,128], index: 7, kind: output, shape index: {}]
  %s8 = sld [smem:[#allocation0]]
  $region77: #{tpu_custom_call.1} parent=0
    _
  %s10 = ssub.s32 1, %s8
  %s11 = scalar_select 0, %s10, %s8
  $region1: #{tpu_custom_call.1} parent=0
    #allocation4 [shape = 'u8[16384]{0}', space=vmem, size = 0x4000, scoped, tag = 'input window, operand 0']
    #allocation5 [shape = 's32[2]{0}', space=sflag, size = 0x8, scoped, tag = 'scoped memory for tpu_custom_call.1']
    #allocation6 [shape = 's32[2]{0}', space=sflag, size = 0x8, scoped, tag = 'scoped memory for tpu_custom_call.1']
    #allocation7 [shape = 'u8[98304]{0}', space=vmem, size = 0x18000, scoped, tag = 'input window, operand 1, single buffered']
    #allocation8 [shape = 's32[1]{0}', space=sflag, size = 0x4, scoped, tag = 'scoped memory for tpu_custom_call.1']
    #allocation9 [shape = 'u8[196608]{0}', space=vmem, size = 0x30000, scoped, tag = 'input window, operand 3, single buffered']
    #allocation10 [shape = 'u8[131072]{0}', space=vmem, size = 0x20000, scoped, tag = 'input window, operand 5, single buffered']
    #allocation11 [shape = 's32[1]{0}', space=sflag, size = 0x4, scoped, tag = 'scoped memory for tpu_custom_call.1']
    #allocation12 [shape = 'u8[32768]{0}', space=vmem, size = 0x8000, scoped, tag = 'output window, operand 0']
    %12 = vsyncpa [#allocation5], 0
    %s13 = scalar_lea.sflag [#allocation5], 1
    %14 = vsyncpa %s13, 0
    %15 = vsyncpa [#allocation8], 0
    %16 = vsyncpa [#allocation11], 0
    %17 = vsyncpa [#allocation6], 0
    %s18 = scalar_lea.sflag [#allocation6], 1
    %19 = vsyncpa %s18, 0
    loop: start=0, step=1, limit=4
    $region2: #{tpu_custom_call.1} parent=1 // loop_pre_header
      _
    $region3: #{tpu_custom_call.1} parent=1 // loop_header
      %s21 = sphi 0, %s25
      %p22 = scmp.ge.s32.totalorder %s21, 4
      %s31 = sphi 0, %s33
      %s34 = sphi 0, %s31
      %s35 = sphi 0, %s34
      %s51 = sphi 0, %s35
      %s55 = sphi 0, %s55
      %s57 = sphi 0, %s55
      %s58 = sphi 0, %s57
      %s72 = sphi 0, %s58
      %s76 = sphi 0, %s76
      %s78 = sphi 0, %s76
      %s79 = sphi 0, %s78
      %s93 = sphi 0, %s79
      %s97 = sphi 0, %s97
      %s99 = sphi 0, %s97
      %s100 = sphi 0, %s99
      %s114 = sphi 0, %s100
      %s118 = sphi 0, %s118
      %s120 = sphi 0, %s118
      %s121 = sphi 0, %s120
      %s135 = sphi 0, %s121
      %s139 = sphi 0, %s139
      %s141 = sphi 0, %s139
      %s142 = sphi 0, %s141
      %s156 = sphi 0, %s142
      %s160 = sphi 0, %s160
      %s162 = sphi 0, %s160
      %s163 = sphi 0, %s162
      %s177 = sphi 0, %s163
      %s183 = sphi 0, %s185
      %s186 = sphi 0, %s183
      %s187 = sphi 0, %s186
      %s203 = sphi 0, %s187
    $region4: #{tpu_custom_call.1} parent=1 // loop_header_branch
      %24 = sbr.rel (%p22) target = $region8
    $region5: #{tpu_custom_call.1} parent=1 // loop_body
      %s26 = ssub.s32 %s21, 1
      %s27 = ssub.s32 %s21, 2
      %s28 = sadd.s32 %s21, 1
      %s29 = ssub.s32 %s21, %s28
      %p30 = scmp.eq.s32.totalorder %s29, 0
      %s32 = sadd.s32 %s31, 1
      %s33 = scalar_select %p30, %s31, %s32
      %p36 = pneg %p30
      %p37 = scmp.eq.s32.totalorder %s21, 1
      %p38 = por %p36, %p37
      %p39 = scmp.ne.s32.totalorder %s31, %s34
      %p40 = scmp.eq.s32.totalorder %s21, 0
      %p41 = por %p39, %p40
      %p42 = scmp.ne.s32.totalorder %s31, %s34
      %p43 = scmp.eq.s32.totalorder %s26, 1
      %p44 = por %p42, %p43
      %p45 = scmp.ne.s32.totalorder %s34, %s35
      %p46 = scmp.eq.s32.totalorder %s26, 0
      %p47 = por %p45, %p46
      %p48 = scmp.ne.s32.totalorder %s34, %s35
      %p49 = scmp.eq.s32.totalorder %s27, 1
      %p50 = por %p48, %p49
      %p52 = scmp.ne.s32.totalorder %s35, %s51
      %p53 = scmp.eq.s32.totalorder %s27, 0
      %p54 = por %p52, %p53
      %s56 = sadd.s32 %s55, 1
      %p59 = scmp.eq.s32.totalorder %s21, 1
      %p60 = scmp.ne.s32.totalorder %s55, %s57
      %p61 = scmp.eq.s32.totalorder %s21, 0
      %p62 = por %p60, %p61
      %p63 = scmp.ne.s32.totalorder %s55, %s57
      %p64 = scmp.eq.s32.totalorder %s26, 1
      %p65 = por %p63, %p64
      %p66 = scmp.ne.s32.totalorder %s57, %s58
      %p67 = scmp.eq.s32.totalorder %s26, 0
      %p68 = por %p66, %p67
      %p69 = scmp.ne.s32.totalorder %s57, %s58
      %p70 = scmp.eq.s32.totalorder %s27, 1
      %p71 = por %p69, %p70
      %p73 = scmp.ne.s32.totalorder %s58, %s72
      %p74 = scmp.eq.s32.totalorder %s27, 0
      %p75 = por %p73, %p74
      %s77 = sadd.s32 %s76, 1
      %p80 = scmp.eq.s32.totalorder %s21, 1
      %p81 = scmp.ne.s32.totalorder %s76, %s78
      %p82 = scmp.eq.s32.totalorder %s21, 0
      %p83 = por %p81, %p82
      %p84 = scmp.ne.s32.totalorder %s76, %s78
      %p85 = scmp.eq.s32.totalorder %s26, 1
      %p86 = por %p84, %p85
      %p87 = scmp.ne.s32.totalorder %s78, %s79
      %p88 = scmp.eq.s32.totalorder %s26, 0
      %p89 = por %p87, %p88
      %p90 = scmp.ne.s32.totalorder %s78, %s79
      %p91 = scmp.eq.s32.totalorder %s27, 1
      %p92 = por %p90, %p91
      %p94 = scmp.ne.s32.totalorder %s79, %s93
      %p95 = scmp.eq.s32.totalorder %s27, 0
      %p96 = por %p94, %p95
      %s98 = sadd.s32 %s97, 1
      %p101 = scmp.eq.s32.totalorder %s21, 1
      %p102 = scmp.ne.s32.totalorder %s97, %s99
      %p103 = scmp.eq.s32.totalorder %s21, 0
      %p104 = por %p102, %p103
      %p105 = scmp.ne.s32.totalorder %s97, %s99
      %p106 = scmp.eq.s32.totalorder %s26, 1
      %p107 = por %p105, %p106
      %p108 = scmp.ne.s32.totalorder %s99, %s100
      %p109 = scmp.eq.s32.totalorder %s26, 0
      %p110 = por %p108, %p109
      %p111 = scmp.ne.s32.totalorder %s99, %s100
      %p112 = scmp.eq.s32.totalorder %s27, 1
      %p113 = por %p111, %p112
      %p115 = scmp.ne.s32.totalorder %s100, %s114
      %p116 = scmp.eq.s32.totalorder %s27, 0
      %p117 = por %p115, %p116
      %s119 = sadd.s32 %s118, 1
      %p122 = scmp.eq.s32.totalorder %s21, 1
      %p123 = scmp.ne.s32.totalorder %s118, %s120
      %p124 = scmp.eq.s32.totalorder %s21, 0
      %p125 = por %p123, %p124
      %p126 = scmp.ne.s32.totalorder %s118, %s120
      %p127 = scmp.eq.s32.totalorder %s26, 1
      %p128 = por %p126, %p127
      %p129 = scmp.ne.s32.totalorder %s120, %s121
      %p130 = scmp.eq.s32.totalorder %s26, 0
      %p131 = por %p129, %p130
      %p132 = scmp.ne.s32.totalorder %s120, %s121
      %p133 = scmp.eq.s32.totalorder %s27, 1
      %p134 = por %p132, %p133
      %p136 = scmp.ne.s32.totalorder %s121, %s135
      %p137 = scmp.eq.s32.totalorder %s27, 0
      %p138 = por %p136, %p137
      %s140 = sadd.s32 %s139, 1
      %p143 = scmp.eq.s32.totalorder %s21, 1
      %p144 = scmp.ne.s32.totalorder %s139, %s141
      %p145 = scmp.eq.s32.totalorder %s21, 0
      %p146 = por %p144, %p145
      %p147 = scmp.ne.s32.totalorder %s139, %s141
      %p148 = scmp.eq.s32.totalorder %s26, 1
      %p149 = por %p147, %p148
      %p150 = scmp.ne.s32.totalorder %s141, %s142
      %p151 = scmp.eq.s32.totalorder %s26, 0
      %p152 = por %p150, %p151
      %p153 = scmp.ne.s32.totalorder %s141, %s142
      %p154 = scmp.eq.s32.totalorder %s27, 1
      %p155 = por %p153, %p154
      %p157 = scmp.ne.s32.totalorder %s142, %s156
      %p158 = scmp.eq.s32.totalorder %s27, 0
      %p159 = por %p157, %p158
      %s161 = sadd.s32 %s160, 1
      %p164 = scmp.eq.s32.totalorder %s21, 1
      %p165 = scmp.ne.s32.totalorder %s160, %s162
      %p166 = scmp.eq.s32.totalorder %s21, 0
      %p167 = por %p165, %p166
      %p168 = scmp.ne.s32.totalorder %s160, %s162
      %p169 = scmp.eq.s32.totalorder %s26, 1
      %p170 = por %p168, %p169
      %p171 = scmp.ne.s32.totalorder %s162, %s163
      %p172 = scmp.eq.s32.totalorder %s26, 0
      %p173 = por %p171, %p172
      %p174 = scmp.ne.s32.totalorder %s162, %s163
      %p175 = scmp.eq.s32.totalorder %s27, 1
      %p176 = por %p174, %p175
      %p178 = scmp.ne.s32.totalorder %s163, %s177
      %p179 = scmp.eq.s32.totalorder %s27, 0
      %p180 = por %p178, %p179
      %s181 = ssub.s32 %s21, %s28
      %p182 = scmp.eq.s32.totalorder %s181, 0
      %s184 = sadd.s32 %s183, 1
      %s185 = scalar_select %p182, %s183, %s184
      %p188 = pneg %p182
      %p189 = scmp.eq.s32.totalorder %s21, 1
      %p190 = por %p188, %p189
      %p191 = scmp.ne.s32.totalorder %s183, %s186
      %p192 = scmp.eq.s32.totalorder %s21, 0
      %p193 = por %p191, %p192
      %p194 = scmp.ne.s32.totalorder %s183, %s186
      %p195 = scmp.eq.s32.totalorder %s26, 1
      %p196 = por %p194, %p195
      %p197 = scmp.ne.s32.totalorder %s186, %s187
      %p198 = scmp.eq.s32.totalorder %s26, 0
      %p199 = por %p197, %p198
      %p200 = scmp.ne.s32.totalorder %s186, %s187
      %p201 = scmp.eq.s32.totalorder %s27, 1
      %p202 = por %p200, %p201
      %p204 = scmp.ne.s32.totalorder %s187, %s203
      %p205 = scmp.eq.s32.totalorder %s27, 0
      %p206 = por %p204, %p205
      %p207 = scmp.le.s32.totalorder 1, %s21
      %p208 = scmp.lt.s32.totalorder %s21, 3
      %p209 = pnand %p207, %p208
      %p210 = pneg %p209
      // Predicated region
      $region9: #{tpu_custom_call.1} parent=5 // pred_check
        _
      $region10: #{tpu_custom_call.1} parent=5 // pred_check_branch
        %212 = sbr.rel (%p209) target = $region12
      $region11: #{tpu_custom_call.1} parent=5 // pred_region
        %s213 = ssub.s32 %s21, 1
        // Predicated region
        $region13: #{tpu_custom_call.1} parent=11 // pred_check
          %p214 = pneg %p68
        $region14: #{tpu_custom_call.1} parent=11 // pred_check_branch
          %216 = sbr.rel (%p214) target = $region16
        $region15: #{tpu_custom_call.1} parent=11 // pred_region
          %s218 = ssub.s32 3072, 3072
          %219 = vsyncadd [#allocation8], %s218
          %s220 = sshll.u32 [#allocation7], 4
          %s221 = int_to_ptr.vmem [resolvable:$true] %s220
          %226 = dma.hbm_to_vmem [thread:$0]  %s1, 3072, %s221, [#allocation8], 128, 128, 8
        $region16: #{tpu_custom_call.1} parent=11 // pred_fallthru
          _
        // Predicated region
        $region17: #{tpu_custom_call.1} parent=11 // pred_check
          %p227 = pneg %p89
        $region18: #{tpu_custom_call.1} parent=11 // pred_check_branch
          %229 = sbr.rel (%p227) target = $region20
        $region19: #{tpu_custom_call.1} parent=11 // pred_region
          _
        $region20: #{tpu_custom_call.1} parent=11 // pred_fallthru
          _
        // Predicated region
        $region21: #{tpu_custom_call.1} parent=11 // pred_check
          %p230 = pneg %p110
        $region22: #{tpu_custom_call.1} parent=11 // pred_check_branch
          %232 = sbr.rel (%p230) target = $region24
        $region23: #{tpu_custom_call.1} parent=11 // pred_region
          %s234 = ssub.s32 6144, 6144
          %235 = vsyncadd [#allocation8], %s234
          %s236 = sshll.u32 [#allocation9], 4
          %s237 = int_to_ptr.vmem [resolvable:$true] %s236
          %242 = dma.hbm_to_vmem [thread:$0]  %s3, 6144, %s237, [#allocation8], 128, 128, 8
        $region24: #{tpu_custom_call.1} parent=11 // pred_fallthru
          _
        // Predicated region
        $region25: #{tpu_custom_call.1} parent=11 // pred_check
          %p243 = pneg %p131
        $region26: #{tpu_custom_call.1} parent=11 // pred_check_branch
          %245 = sbr.rel (%p243) target = $region28
        $region27: #{tpu_custom_call.1} parent=11 // pred_region
          _
        $region28: #{tpu_custom_call.1} parent=11 // pred_fallthru
          _
        // Predicated region
        $region29: #{tpu_custom_call.1} parent=11 // pred_check
          %p246 = pneg %p152
        $region30: #{tpu_custom_call.1} parent=11 // pred_check_branch
          %248 = sbr.rel (%p246) target = $region32
        $region31: #{tpu_custom_call.1} parent=11 // pred_region
          %s250 = ssub.s32 4096, 4096
          %251 = vsyncadd [#allocation11], %s250
          %s252 = sshll.u32 [#allocation10], 4
          %s253 = int_to_ptr.vmem [resolvable:$true] %s252
          %258 = dma.hbm_to_vmem [thread:$0]  %s5, 4096, %s253, [#allocation11], 128, 128, 8
        $region32: #{tpu_custom_call.1} parent=11 // pred_fallthru
          _
        // Predicated region
        $region33: #{tpu_custom_call.1} parent=11 // pred_check
          %p259 = pneg %p173
        $region34: #{tpu_custom_call.1} parent=11 // pred_check_branch
          %261 = sbr.rel (%p259) target = $region36
        $region35: #{tpu_custom_call.1} parent=11 // pred_region
          _
        $region36: #{tpu_custom_call.1} parent=11 // pred_fallthru
          _
      $region12: #{tpu_custom_call.1} parent=5 // pred_fallthru
        _
      %p262 = scmp.lt.s32.totalorder %s21, 2
      // Predicated region
      $region37: #{tpu_custom_call.1} parent=5 // pred_check
        %p263 = pneg %p262
      $region38: #{tpu_custom_call.1} parent=5 // pred_check_branch
        %265 = sbr.rel (%p263) target = $region40
      $region39: #{tpu_custom_call.1} parent=5 // pred_region
        // Predicated region
        $region41: #{tpu_custom_call.1} parent=39 // pred_check
          %p266 = pneg %p41
        $region42: #{tpu_custom_call.1} parent=39 // pred_check_branch
          %268 = sbr.rel (%p266) target = $region44
        $region43: #{tpu_custom_call.1} parent=39 // pred_region
          %s269 = sand.u32 %s31, 1
          %s270 = scalar_lea.sflag [#allocation5], %s269
          %s271 = sand.u32 %s31, 1
          %s272 = smul.addr %s271, 16
          %s273 = scalar_lea.vmem [#allocation4], %s272
          %s275 = ssub.s32 256, 256
          %276 = vsyncadd %s270, %s275
          %s277 = smul.addr %s21, 2
          %s278 = smul.addr %s277, 128
          %s279 = scalar_lea.hbm %s0, %s278
          %s280 = sshll.u32 %s273, 4
          %s281 = int_to_ptr.vmem [resolvable:$true] %s280
          %286 = dma.hbm_to_vmem [thread:$0]  %s279, 256, %s281, %s270, 128, 128, 8
        $region44: #{tpu_custom_call.1} parent=39 // pred_fallthru
          _
      $region40: #{tpu_custom_call.1} parent=5 // pred_fallthru
        _
      %p287 = scmp.le.s32.totalorder 1, %s21
      %p288 = scmp.lt.s32.totalorder %s21, 3
      %p289 = pnand %p287, %p288
      %p290 = pneg %p289
      // Predicated region
      $region45: #{tpu_custom_call.1} parent=5 // pred_check
        _
      $region46: #{tpu_custom_call.1} parent=5 // pred_check_branch
        %292 = sbr.rel (%p289) target = $region48
      $region47: #{tpu_custom_call.1} parent=5 // pred_region
        %s293 = ssub.s32 %s21, 1
        %s294 = sand.u32 %s34, 1
        %s295 = scalar_lea.sflag [#allocation5], %s294
        %s296 = sand.u32 %s34, 1
        %s297 = smul.addr %s296, 16
        %s298 = scalar_lea.vmem [#allocation4], %s297
        // Predicated region
        $region49: #{tpu_custom_call.1} parent=47 // pred_check
          %p299 = pneg %p47
        $region50: #{tpu_custom_call.1} parent=47 // pred_check_branch
          %301 = sbr.rel (%p299) target = $region52
        $region51: #{tpu_custom_call.1} parent=47 // pred_region
          %302 = dma.done %s295, 256
        $region52: #{tpu_custom_call.1} parent=47 // pred_fallthru
          _
        // Predicated region
        $region53: #{tpu_custom_call.1} parent=47 // pred_check
          %p303 = pneg %p68
        $region54: #{tpu_custom_call.1} parent=47 // pred_check_branch
          %305 = sbr.rel (%p303) target = $region56
        $region55: #{tpu_custom_call.1} parent=47 // pred_region
          %306 = dma.done [#allocation8], 3072
        $region56: #{tpu_custom_call.1} parent=47 // pred_fallthru
          _
        // Predicated region
        $region57: #{tpu_custom_call.1} parent=47 // pred_check
          %p307 = pneg %p110
        $region58: #{tpu_custom_call.1} parent=47 // pred_check_branch
          %309 = sbr.rel (%p307) target = $region60
        $region59: #{tpu_custom_call.1} parent=47 // pred_region
          %310 = dma.done [#allocation8], 6144
        $region60: #{tpu_custom_call.1} parent=47 // pred_fallthru
          _
        // Predicated region
        $region61: #{tpu_custom_call.1} parent=47 // pred_check
          %p311 = pneg %p152
        $region62: #{tpu_custom_call.1} parent=47 // pred_check_branch
          %313 = sbr.rel (%p311) target = $region64
        $region63: #{tpu_custom_call.1} parent=47 // pred_region
          %314 = dma.done [#allocation11], 4096
        $region64: #{tpu_custom_call.1} parent=47 // pred_fallthru
          _
        %s315 = sand.u32 %s34, 1
        %s316 = scalar_lea.sflag [#allocation5], %s315
        %s317 = sand.u32 %s34, 1
        %s318 = smul.addr %s317, 16
        %s319 = scalar_lea.vmem [#allocation4], %s318
        %p320 = pneg %p47
        %p321 = pneg %p44
        %p322 = pneg %p68
        %p323 = pneg %p65
        %p324 = pneg %p89
        %p325 = pneg %p86
        %p326 = pneg %p110
        %p327 = pneg %p107
        %p328 = pneg %p131
        %p329 = pneg %p128
        %p330 = pneg %p152
        %p331 = pneg %p149
        %p332 = pneg %p173
        %p333 = pneg %p170
        %p334 = pneg %p199
        %p335 = pneg %p196
        %s336 = sand.u32 %s186, 1
        %s337 = scalar_lea.sflag [#allocation6], %s336
        %s338 = sand.u32 %s186, 1
        %s339 = smul.addr %s338, 32
        %s340 = scalar_lea.vmem [#allocation12], %s339
        %vm341 = vcmask 516096
        %342 = vst.msk [vmem:[#allocation2] sm:$0x1] %vm341, 0.0
        %343 = vst.msk [vmem:[#allocation2 + $0x11] sm:$0x1] %vm341, 0.0
        %v344 = vld [vmem:[%s298] sm:$0xff]
        %v345 = vld [vmem:[%s298 + $0x8] sm:$0xff]
        %vm346 = vcmask 523264
        %347 = vst.msk [vmem:[#allocation2 + $0x1] sm:$0xff] %vm346, %v344
        %348 = vst.msk [vmem:[#allocation2 + $0x9] sm:$0xff] %vm346, %v345
        %v349 = vld [vmem:[#allocation2] sm:$0xff]
        %v350 = vld [vmem:[#allocation2 + $0x8] sm:$0xff]
        %v351 = vld [vmem:[#allocation7] sm:$0xff]
        %v352 = vld [vmem:[#allocation7 + $0x8] sm:$0xff]
        %v353 = vld [vmem:[#allocation7 + $0x10] sm:$0xff]
        %v354 = vld [vmem:[#allocation7 + $0x18] sm:$0xff]
        %v355 = vld [vmem:[#allocation7 + $0x20] sm:$0xff]
        %v356 = vld [vmem:[#allocation7 + $0x28] sm:$0xff]
        %v357 = vld [vmem:[#allocation7 + $0x30] sm:$0xff]
        %v358 = vld [vmem:[#allocation7 + $0x38] sm:$0xff]
        %v359 = vld [vmem:[#allocation2 + $0x1] sm:$0xff]
        %v360 = vld [vmem:[#allocation2 + $0x9] sm:$0xff]
        %s361 = scalar_lea.vmem [#allocation7], 64
        %v362 = vld [vmem:[%s361] sm:$0xff]
        %v363 = vld [vmem:[%s361 + $0x8] sm:$0xff]
        %v364 = vld [vmem:[%s361 + $0x10] sm:$0xff]
        %v365 = vld [vmem:[%s361 + $0x18] sm:$0xff]
        %v366 = vld [vmem:[%s361 + $0x20] sm:$0xff]
        %v367 = vld [vmem:[%s361 + $0x28] sm:$0xff]
        %v368 = vld [vmem:[%s361 + $0x30] sm:$0xff]
        %v369 = vld [vmem:[%s361 + $0x38] sm:$0xff]
        %v371 = vsel %vm346, %v359, 0
        %v374 = vsel %vm346, %v360, 0
        %376 = vmatprep.subr.mxu0 0.0
        %377 = vmatpush1.msra.mxu0 %v362
        %378 = vmatprep.subr.mxu0 0.0
        %379 = vmatpush1.msra.mxu0 %v363
        %380 = vmatprep.subr.mxu0 0.0
        %381 = vmatpush1.msra.mxu0 %v364
        %382 = vmatprep.subr.mxu0 0.0
        %383 = vmatpush1.msra.mxu0 %v365
        %384 = vmatprep.subr.mxu0 0.0
        %385 = vmatpush1.msra.mxu0 %v366
        %386 = vmatprep.subr.mxu0 0.0
        %387 = vmatpush1.msra.mxu0 %v367
        %388 = vmatprep.subr.mxu0 0.0
        %389 = vmatpush1.msra.mxu0 %v368
        %390 = vmatprep.subr.mxu0 0.0
        %391 = vmatpush1.msra.mxu0 %v369
        %392 = vmatprep.subr.mxu0 0.0
        %393 = vmatpush1.msra.mxu0 0.0
        %394 = vmatprep.subr.mxu0 0.0
        %395 = vmatpush1.msra.mxu0 0.0
        %396 = vmatprep.subr.mxu0 0.0
        %397 = vmatpush1.msra.mxu0 0.0
        %398 = vmatprep.subr.mxu0 0.0
        %399 = vmatpush1.msra.mxu0 0.0
        %400 = vmatprep.subr.mxu0 0.0
        %401 = vmatpush1.msra.mxu0 0.0
        %402 = vmatprep.subr.mxu0 0.0
        %403 = vmatpush1.msra.mxu0 0.0
        %404 = vmatprep.subr.mxu0 0.0
        %405 = vmatpush1.msra.mxu0 0.0
        %406 = vmatprep.subr.mxu0 0.0
        %407 = vmatpush1.msra.mxu0 0.0
        %408 = vmatprep.subr.mxu0 0.0
        %409 = vmatpush1.msra.mxu0 0.0
        %410 = vmatprep.subr.mxu0 0.0
        %411 = vmatpush1.msra.mxu0 0.0
        %412 = vmatprep.subr.mxu0 0.0
        %413 = vmatpush1.msra.mxu0 0.0
        %414 = vmatprep.subr.mxu0 0.0
        %415 = vmatpush1.msra.mxu0 0.0
        %416 = vmatprep.subr.mxu0 0.0
        %417 = vmatpush1.msra.mxu0 0.0
        %418 = vmatprep.subr.mxu0 0.0
        %419 = vmatpush1.msra.mxu0 0.0
        %420 = vmatprep.subr.mxu0 0.0
        %421 = vmatpush1.msra.mxu0 0.0
        %422 = vmatprep.subr.mxu0 0.0
        %423 = vmatpush1.msra.mxu0 0.0
        %424 = vmatprep.subr.mxu0 0.0
        %425 = vmatpush1.msra.mxu0 0.0
        %426 = vmatprep.subr.mxu0 0.0
        %427 = vmatpush1.msra.mxu0 0.0
        %428 = vmatprep.subr.mxu0 0.0
        %429 = vmatpush1.msra.mxu0 0.0
        %430 = vmatprep.subr.mxu0 0.0
        %431 = vmatpush1.msra.mxu0 0.0
        %432 = vmatprep.subr.mxu0 0.0
        %433 = vmatpush1.msra.mxu0 0.0
        %434 = vmatprep.subr.mxu0 0.0
        %435 = vmatpush1.msra.mxu0 0.0
        %436 = vmatprep.subr.mxu0 0.0
        %437 = vmatpush1.msra.mxu0 0.0
        %438 = vmatprep.subr.mxu0 0.0
        %439 = vmatpush1.msra.mxu0 0.0
        %440 = vmatprep.mubr.f32.mxu0 0.0
        %441 = vmatmul.mubr.f32.gmra.mrb[0].mxu0 %v371
        %v442 = vpop.f32.mrb[0].mxu0
        %v443 = vadd.f32 0.0, %v442
        %v444 = vpop.f32.mrb[0].mxu0
        %445 = vmatprep.mubr.f32.mxu0 0.0
        %446 = vmatmul.mubr.f32.gmra.mrb[0].mxu0 %v374
        %v447 = vpop.f32.mrb[0].mxu0
        %v448 = vadd.f32 0.0, %v447
        %v449 = vpop.f32.mrb[0].mxu0
        %450 = vdwg.mxu0
        %v452 = vsel %vm346, %v349, 0
        %v455 = vsel %vm346, %v350, 0
        %457 = vmatprep.subr.mxu0 0.0
        %458 = vmatpush1.msra.mxu0 %v351
        %459 = vmatprep.subr.mxu0 0.0
        %460 = vmatpush1.msra.mxu0 %v352
        %461 = vmatprep.subr.mxu0 0.0
        %462 = vmatpush1.msra.mxu0 %v353
        %463 = vmatprep.subr.mxu0 0.0
        %464 = vmatpush1.msra.mxu0 %v354
        %465 = vmatprep.subr.mxu0 0.0
        %466 = vmatpush1.msra.mxu0 %v355
        %467 = vmatprep.subr.mxu0 0.0
        %468 = vmatpush1.msra.mxu0 %v356
        %469 = vmatprep.subr.mxu0 0.0
        %470 = vmatpush1.msra.mxu0 %v357
        %471 = vmatprep.subr.mxu0 0.0
        %472 = vmatpush1.msra.mxu0 %v358
        %473 = vmatprep.subr.mxu0 0.0
        %474 = vmatpush1.msra.mxu0 0.0
        %475 = vmatprep.subr.mxu0 0.0
        %476 = vmatpush1.msra.mxu0 0.0
        %477 = vmatprep.subr.mxu0 0.0
        %478 = vmatpush1.msra.mxu0 0.0
        %479 = vmatprep.subr.mxu0 0.0
        %480 = vmatpush1.msra.mxu0 0.0
        %481 = vmatprep.subr.mxu0 0.0
        %482 = vmatpush1.msra.mxu0 0.0
        %483 = vmatprep.subr.mxu0 0.0
        %484 = vmatpush1.msra.mxu0 0.0
        %485 = vmatprep.subr.mxu0 0.0
        %486 = vmatpush1.msra.mxu0 0.0
        %487 = vmatprep.subr.mxu0 0.0
        %488 = vmatpush1.msra.mxu0 0.0
        %489 = vmatprep.subr.mxu0 0.0
        %490 = vmatpush1.msra.mxu0 0.0
        %491 = vmatprep.subr.mxu0 0.0
        %492 = vmatpush1.msra.mxu0 0.0
        %493 = vmatprep.subr.mxu0 0.0
        %494 = vmatpush1.msra.mxu0 0.0
        %495 = vmatprep.subr.mxu0 0.0
        %496 = vmatpush1.msra.mxu0 0.0
        %497 = vmatprep.subr.mxu0 0.0
        %498 = vmatpush1.msra.mxu0 0.0
        %499 = vmatprep.subr.mxu0 0.0
        %500 = vmatpush1.msra.mxu0 0.0
        %501 = vmatprep.subr.mxu0 0.0
        %502 = vmatpush1.msra.mxu0 0.0
        %503 = vmatprep.subr.mxu0 0.0
        %504 = vmatpush1.msra.mxu0 0.0
        %505 = vmatprep.subr.mxu0 0.0
        %506 = vmatpush1.msra.mxu0 0.0
        %507 = vmatprep.subr.mxu0 0.0
        %508 = vmatpush1.msra.mxu0 0.0
        %509 = vmatprep.subr.mxu0 0.0
        %510 = vmatpush1.msra.mxu0 0.0
        %511 = vmatprep.subr.mxu0 0.0
        %512 = vmatpush1.msra.mxu0 0.0
        %513 = vmatprep.subr.mxu0 0.0
        %514 = vmatpush1.msra.mxu0 0.0
        %515 = vmatprep.subr.mxu0 0.0
        %516 = vmatpush1.msra.mxu0 0.0
        %517 = vmatprep.subr.mxu0 0.0
        %518 = vmatpush1.msra.mxu0 0.0
        %519 = vmatprep.subr.mxu0 0.0
        %520 = vmatpush1.msra.mxu0 0.0
        %521 = vmatprep.mubr.f32.mxu0 0.0
        %522 = vmatmul.mubr.f32.gmra.mrb[0].mxu0 %v452
        %v523 = vpop.f32.mrb[0].mxu0
        %v524 = vadd.f32 %v443, %v523
        %v525 = vpop.f32.mrb[0].mxu0
        %526 = vmatprep.mubr.f32.mxu0 0.0
        %527 = vmatmul.mubr.f32.gmra.mrb[0].mxu0 %v455
        %v528 = vpop.f32.mrb[0].mxu0
        %v529 = vadd.f32 %v448, %v528
        %v530 = vpop.f32.mrb[0].mxu0
        %531 = vdwg.mxu0
        %v532 = vld [vmem:[#allocation2 + $0x2] sm:$0xff]
        %v533 = vld [vmem:[#allocation2 + $0xa] sm:$0xff]
        %s534 = scalar_lea.vmem [#allocation7], 128
        %v535 = vld [vmem:[%s534] sm:$0xff]
        %v536 = vld [vmem:[%s534 + $0x8] sm:$0xff]
        %v537 = vld [vmem:[%s534 + $0x10] sm:$0xff]
        %v538 = vld [vmem:[%s534 + $0x18] sm:$0xff]
        %v539 = vld [vmem:[%s534 + $0x20] sm:$0xff]
        %v540 = vld [vmem:[%s534 + $0x28] sm:$0xff]
        %v541 = vld [vmem:[%s534 + $0x30] sm:$0xff]
        %v542 = vld [vmem:[%s534 + $0x38] sm:$0xff]
        %v544 = vsel %vm346, %v532, 0
        %v547 = vsel %vm346, %v533, 0
        %549 = vmatprep.subr.mxu0 0.0
        %550 = vmatpush1.msra.mxu0 %v535
        %551 = vmatprep.subr.mxu0 0.0
        %552 = vmatpush1.msra.mxu0 %v536
        %553 = vmatprep.subr.mxu0 0.0
        %554 = vmatpush1.msra.mxu0 %v537
        %555 = vmatprep.subr.mxu0 0.0
        %556 = vmatpush1.msra.mxu0 %v538
        %557 = vmatprep.subr.mxu0 0.0
        %558 = vmatpush1.msra.mxu0 %v539
        %559 = vmatprep.subr.mxu0 0.0
        %560 = vmatpush1.msra.mxu0 %v540
        %561 = vmatprep.subr.mxu0 0.0
        %562 = vmatpush1.msra.mxu0 %v541
        %563 = vmatprep.subr.mxu0 0.0
        %564 = vmatpush1.msra.mxu0 %v542
        %565 = vmatprep.subr.mxu0 0.0
        %566 = vmatpush1.msra.mxu0 0.0
        %567 = vmatprep.subr.mxu0 0.0
        %568 = vmatpush1.msra.mxu0 0.0
        %569 = vmatprep.subr.mxu0 0.0
        %570 = vmatpush1.msra.mxu0 0.0
        %571 = vmatprep.subr.mxu0 0.0
        %572 = vmatpush1.msra.mxu0 0.0
        %573 = vmatprep.subr.mxu0 0.0
        %574 = vmatpush1.msra.mxu0 0.0
        %575 = vmatprep.subr.mxu0 0.0
        %576 = vmatpush1.msra.mxu0 0.0
        %577 = vmatprep.subr.mxu0 0.0
        %578 = vmatpush1.msra.mxu0 0.0
        %579 = vmatprep.subr.mxu0 0.0
        %580 = vmatpush1.msra.mxu0 0.0
        %581 = vmatprep.subr.mxu0 0.0
        %582 = vmatpush1.msra.mxu0 0.0
        %583 = vmatprep.subr.mxu0 0.0
        %584 = vmatpush1.msra.mxu0 0.0
        %585 = vmatprep.subr.mxu0 0.0
        %586 = vmatpush1.msra.mxu0 0.0
        %587 = vmatprep.subr.mxu0 0.0
        %588 = vmatpush1.msra.mxu0 0.0
        %589 = vmatprep.subr.mxu0 0.0
        %590 = vmatpush1.msra.mxu0 0.0
        %591 = vmatprep.subr.mxu0 0.0
        %592 = vmatpush1.msra.mxu0 0.0
        %593 = vmatprep.subr.mxu0 0.0
        %594 = vmatpush1.msra.mxu0 0.0
        %595 = vmatprep.subr.mxu0 0.0
        %596 = vmatpush1.msra.mxu0 0.0
        %597 = vmatprep.subr.mxu0 0.0
        %598 = vmatpush1.msra.mxu0 0.0
        %599 = vmatprep.subr.mxu0 0.0
        %600 = vmatpush1.msra.mxu0 0.0
        %601 = vmatprep.subr.mxu0 0.0
        %602 = vmatpush1.msra.mxu0 0.0
        %603 = vmatprep.subr.mxu0 0.0
        %604 = vmatpush1.msra.mxu0 0.0
        %605 = vmatprep.subr.mxu0 0.0
        %606 = vmatpush1.msra.mxu0 0.0
        %607 = vmatprep.subr.mxu0 0.0
        %608 = vmatpush1.msra.mxu0 0.0
        %609 = vmatprep.subr.mxu0 0.0
        %610 = vmatpush1.msra.mxu0 0.0
        %611 = vmatprep.subr.mxu0 0.0
        %612 = vmatpush1.msra.mxu0 0.0
        %613 = vmatprep.mubr.f32.mxu0 0.0
        %614 = vmatmul.mubr.f32.gmra.mrb[0].mxu0 %v544
        %v615 = vpop.f32.mrb[0].mxu0
        %v616 = vadd.f32 0.0, %v615
        %v617 = vpop.f32.mrb[0].mxu0
        %618 = vmatprep.mubr.f32.mxu0 0.0
        %619 = vmatmul.mubr.f32.gmra.mrb[0].mxu0 %v547
        %v620 = vpop.f32.mrb[0].mxu0
        %v621 = vadd.f32 0.0, %v620
        %v622 = vpop.f32.mrb[0].mxu0
        %623 = vdwg.mxu0
        %v624 = vadd.f32 %v524, %v616
        %v625 = vadd.f32 %v529, %v621
        %v626 = vld [vmem:[%s2] sm:$0x1]
        %v628 = vlaneseq
        %v629 = vshrl.u32 %v628, 7
        %v630 = vsub.s32 0, %v629
        %v631 = vrot.slane %v626, %v630
        %v633 = vadd.f32 %v624, %v631
        %v634 = vadd.f32 %v625, %v631
        %v635 = vmax.f32 %v633, 0.0
        %v636 = vmax.f32 %v634, 0.0
        %637 = vst [vmem:[#allocation3] sm:$0x1] 0.0
        %638 = vst [vmem:[#allocation3 + $0x11] sm:$0x1] 0.0
        %639 = vst [vmem:[#allocation3 + $0x1] sm:$0xff] %v635
        %640 = vst [vmem:[#allocation3 + $0x9] sm:$0xff] %v636
        %v641 = vld [vmem:[#allocation3] sm:$0xff]
        %v642 = vld [vmem:[#allocation3 + $0x8] sm:$0xff]
        %v643 = vld [vmem:[#allocation9] sm:$0xff]
        %v644 = vld [vmem:[#allocation9 + $0x8] sm:$0xff]
        %v645 = vld [vmem:[#allocation9 + $0x10] sm:$0xff]
        %v646 = vld [vmem:[#allocation9 + $0x18] sm:$0xff]
        %v647 = vld [vmem:[#allocation9 + $0x20] sm:$0xff]
        %v648 = vld [vmem:[#allocation9 + $0x28] sm:$0xff]
        %v649 = vld [vmem:[#allocation9 + $0x30] sm:$0xff]
        %v650 = vld [vmem:[#allocation9 + $0x38] sm:$0xff]
        %v651 = vld [vmem:[#allocation9 + $0x40] sm:$0xff]
        %v652 = vld [vmem:[#allocation9 + $0x48] sm:$0xff]
        %v653 = vld [vmem:[#allocation9 + $0x50] sm:$0xff]
        %v654 = vld [vmem:[#allocation9 + $0x58] sm:$0xff]
        %v655 = vld [vmem:[#allocation9 + $0x60] sm:$0xff]
        %v656 = vld [vmem:[#allocation9 + $0x68] sm:$0xff]
        %v657 = vld [vmem:[#allocation9 + $0x70] sm:$0xff]
        %v658 = vld [vmem:[#allocation9 + $0x78] sm:$0xff]
        %v659 = vld [vmem:[#allocation3 + $0x1] sm:$0xff]
        %v660 = vld [vmem:[#allocation3 + $0x9] sm:$0xff]
        %s661 = scalar_lea.vmem [#allocation9], 128
        %v662 = vld [vmem:[%s661] sm:$0xff]
        %v663 = vld [vmem:[%s661 + $0x8] sm:$0xff]
        %v664 = vld [vmem:[%s661 + $0x10] sm:$0xff]
        %v665 = vld [vmem:[%s661 + $0x18] sm:$0xff]
        %v666 = vld [vmem:[%s661 + $0x20] sm:$0xff]
        %v667 = vld [vmem:[%s661 + $0x28] sm:$0xff]
        %v668 = vld [vmem:[%s661 + $0x30] sm:$0xff]
        %v669 = vld [vmem:[%s661 + $0x38] sm:$0xff]
        %v670 = vld [vmem:[%s661 + $0x40] sm:$0xff]
        %v671 = vld [vmem:[%s661 + $0x48] sm:$0xff]
        %v672 = vld [vmem:[%s661 + $0x50] sm:$0xff]
        %v673 = vld [vmem:[%s661 + $0x58] sm:$0xff]
        %v674 = vld [vmem:[%s661 + $0x60] sm:$0xff]
        %v675 = vld [vmem:[%s661 + $0x68] sm:$0xff]
        %v676 = vld [vmem:[%s661 + $0x70] sm:$0xff]
        %v677 = vld [vmem:[%s661 + $0x78] sm:$0xff]
        %678 = vmatprep.subr.mxu0 0.0
        %679 = vmatpush1.msra.mxu0 %v662
        %680 = vmatprep.subr.mxu0 0.0
        %681 = vmatpush1.msra.mxu0 %v663
        %682 = vmatprep.subr.mxu0 0.0
        %683 = vmatpush1.msra.mxu0 %v664
        %684 = vmatprep.subr.mxu0 0.0
        %685 = vmatpush1.msra.mxu0 %v665
        %686 = vmatprep.subr.mxu0 0.0
        %687 = vmatpush1.msra.mxu0 %v666
        %688 = vmatprep.subr.mxu0 0.0
        %689 = vmatpush1.msra.mxu0 %v667
        %690 = vmatprep.subr.mxu0 0.0
        %691 = vmatpush1.msra.mxu0 %v668
        %692 = vmatprep.subr.mxu0 0.0
        %693 = vmatpush1.msra.mxu0 %v669
        %694 = vmatprep.subr.mxu0 0.0
        %695 = vmatpush1.msra.mxu0 %v670
        %696 = vmatprep.subr.mxu0 0.0
        %697 = vmatpush1.msra.mxu0 %v671
        %698 = vmatprep.subr.mxu0 0.0
        %699 = vmatpush1.msra.mxu0 %v672
        %700 = vmatprep.subr.mxu0 0.0
        %701 = vmatpush1.msra.mxu0 %v673
        %702 = vmatprep.subr.mxu0 0.0
        %703 = vmatpush1.msra.mxu0 %v674
        %704 = vmatprep.subr.mxu0 0.0
        %705 = vmatpush1.msra.mxu0 %v675
        %706 = vmatprep.subr.mxu0 0.0
        %707 = vmatpush1.msra.mxu0 %v676
        %708 = vmatprep.subr.mxu0 0.0
        %709 = vmatpush1.msra.mxu0 %v677
        %710 = vmatprep.subr.mxu0 0.0
        %711 = vmatpush1.msra.mxu0 0.0
        %712 = vmatprep.subr.mxu0 0.0
        %713 = vmatpush1.msra.mxu0 0.0
        %714 = vmatprep.subr.mxu0 0.0
        %715 = vmatpush1.msra.mxu0 0.0
        %716 = vmatprep.subr.mxu0 0.0
        %717 = vmatpush1.msra.mxu0 0.0
        %718 = vmatprep.subr.mxu0 0.0
        %719 = vmatpush1.msra.mxu0 0.0
        %720 = vmatprep.subr.mxu0 0.0
        %721 = vmatpush1.msra.mxu0 0.0
        %722 = vmatprep.subr.mxu0 0.0
        %723 = vmatpush1.msra.mxu0 0.0
        %724 = vmatprep.subr.mxu0 0.0
        %725 = vmatpush1.msra.mxu0 0.0
        %726 = vmatprep.subr.mxu0 0.0
        %727 = vmatpush1.msra.mxu0 0.0
        %728 = vmatprep.subr.mxu0 0.0
        %729 = vmatpush1.msra.mxu0 0.0
        %730 = vmatprep.subr.mxu0 0.0
        %731 = vmatpush1.msra.mxu0 0.0
        %732 = vmatprep.subr.mxu0 0.0
        %733 = vmatpush1.msra.mxu0 0.0
        %734 = vmatprep.subr.mxu0 0.0
        %735 = vmatpush1.msra.mxu0 0.0
        %736 = vmatprep.subr.mxu0 0.0
        %737 = vmatpush1.msra.mxu0 0.0
        %738 = vmatprep.subr.mxu0 0.0
        %739 = vmatpush1.msra.mxu0 0.0
        %740 = vmatprep.subr.mxu0 0.0
        %741 = vmatpush1.msra.mxu0 0.0
        %742 = vmatprep.mubr.f32.mxu0 0.0
        %743 = vmatmul.mubr.f32.gmra.mrb[0].mxu0 %v659
        %v744 = vpop.f32.mrb[0].mxu0
        %v745 = vadd.f32 0.0, %v744
        %v746 = vpop.f32.mrb[0].mxu0
        %747 = vmatprep.mubr.f32.mxu0 0.0
        %748 = vmatmul.mubr.f32.gmra.mrb[0].mxu0 %v660
        %v749 = vpop.f32.mrb[0].mxu0
        %v750 = vadd.f32 0.0, %v749
        %v751 = vpop.f32.mrb[0].mxu0
        %752 = vdwg.mxu0
        %753 = vmatprep.subr.mxu0 0.0
        %754 = vmatpush1.msra.mxu0 %v643
        %755 = vmatprep.subr.mxu0 0.0
        %756 = vmatpush1.msra.mxu0 %v644
        %757 = vmatprep.subr.mxu0 0.0
        %758 = vmatpush1.msra.mxu0 %v645
        %759 = vmatprep.subr.mxu0 0.0
        %760 = vmatpush1.msra.mxu0 %v646
        %761 = vmatprep.subr.mxu0 0.0
        %762 = vmatpush1.msra.mxu0 %v647
        %763 = vmatprep.subr.mxu0 0.0
        %764 = vmatpush1.msra.mxu0 %v648
        %765 = vmatprep.subr.mxu0 0.0
        %766 = vmatpush1.msra.mxu0 %v649
        %767 = vmatprep.subr.mxu0 0.0
        %768 = vmatpush1.msra.mxu0 %v650
        %769 = vmatprep.subr.mxu0 0.0
        %770 = vmatpush1.msra.mxu0 %v651
        %771 = vmatprep.subr.mxu0 0.0
        %772 = vmatpush1.msra.mxu0 %v652
        %773 = vmatprep.subr.mxu0 0.0
        %774 = vmatpush1.msra.mxu0 %v653
        %775 = vmatprep.subr.mxu0 0.0
        %776 = vmatpush1.msra.mxu0 %v654
        %777 = vmatprep.subr.mxu0 0.0
        %778 = vmatpush1.msra.mxu0 %v655
        %779 = vmatprep.subr.mxu0 0.0
        %780 = vmatpush1.msra.mxu0 %v656
        %781 = vmatprep.subr.mxu0 0.0
        %782 = vmatpush1.msra.mxu0 %v657
        %783 = vmatprep.subr.mxu0 0.0
        %784 = vmatpush1.msra.mxu0 %v658
        %785 = vmatprep.subr.mxu0 0.0
        %786 = vmatpush1.msra.mxu0 0.0
        %787 = vmatprep.subr.mxu0 0.0
        %788 = vmatpush1.msra.mxu0 0.0
        %789 = vmatprep.subr.mxu0 0.0
        %790 = vmatpush1.msra.mxu0 0.0
        %791 = vmatprep.subr.mxu0 0.0
        %792 = vmatpush1.msra.mxu0 0.0
        %793 = vmatprep.subr.mxu0 0.0
        %794 = vmatpush1.msra.mxu0 0.0
        %795 = vmatprep.subr.mxu0 0.0
        %796 = vmatpush1.msra.mxu0 0.0
        %797 = vmatprep.subr.mxu0 0.0
        %798 = vmatpush1.msra.mxu0 0.0
        %799 = vmatprep.subr.mxu0 0.0
        %800 = vmatpush1.msra.mxu0 0.0
        %801 = vmatprep.subr.mxu0 0.0
        %802 = vmatpush1.msra.mxu0 0.0
        %803 = vmatprep.subr.mxu0 0.0
        %804 = vmatpush1.msra.mxu0 0.0
        %805 = vmatprep.subr.mxu0 0.0
        %806 = vmatpush1.msra.mxu0 0.0
        %807 = vmatprep.subr.mxu0 0.0
        %808 = vmatpush1.msra.mxu0 0.0
        %809 = vmatprep.subr.mxu0 0.0
        %810 = vmatpush1.msra.mxu0 0.0
        %811 = vmatprep.subr.mxu0 0.0
        %812 = vmatpush1.msra.mxu0 0.0
        %813 = vmatprep.subr.mxu0 0.0
        %814 = vmatpush1.msra.mxu0 0.0
        %815 = vmatprep.subr.mxu0 0.0
        %816 = vmatpush1.msra.mxu0 0.0
        %817 = vmatprep.mubr.f32.mxu0 0.0
        %818 = vmatmul.mubr.f32.gmra.mrb[0].mxu0 %v641
        %v819 = vpop.f32.mrb[0].mxu0
        %v820 = vadd.f32 %v745, %v819
        %v821 = vpop.f32.mrb[0].mxu0
        %822 = vmatprep.mubr.f32.mxu0 0.0
        %823 = vmatmul.mubr.f32.gmra.mrb[0].mxu0 %v642
        %v824 = vpop.f32.mrb[0].mxu0
        %v825 = vadd.f32 %v750, %v824
        %v826 = vpop.f32.mrb[0].mxu0
        %827 = vdwg.mxu0
        %v828 = vld [vmem:[#allocation3 + $0x2] sm:$0xff]
        %v829 = vld [vmem:[#allocation3 + $0xa] sm:$0xff]
        %s830 = scalar_lea.vmem [#allocation9], 256
        %v831 = vld [vmem:[%s830] sm:$0xff]
        %v832 = vld [vmem:[%s830 + $0x8] sm:$0xff]
        %v833 = vld [vmem:[%s830 + $0x10] sm:$0xff]
        %v834 = vld [vmem:[%s830 + $0x18] sm:$0xff]
        %v835 = vld [vmem:[%s830 + $0x20] sm:$0xff]
        %v836 = vld [vmem:[%s830 + $0x28] sm:$0xff]
        %v837 = vld [vmem:[%s830 + $0x30] sm:$0xff]
        %v838 = vld [vmem:[%s830 + $0x38] sm:$0xff]
        %v839 = vld [vmem:[%s830 + $0x40] sm:$0xff]
        %v840 = vld [vmem:[%s830 + $0x48] sm:$0xff]
        %v841 = vld [vmem:[%s830 + $0x50] sm:$0xff]
        %v842 = vld [vmem:[%s830 + $0x58] sm:$0xff]
        %v843 = vld [vmem:[%s830 + $0x60] sm:$0xff]
        %v844 = vld [vmem:[%s830 + $0x68] sm:$0xff]
        %v845 = vld [vmem:[%s830 + $0x70] sm:$0xff]
        %v846 = vld [vmem:[%s830 + $0x78] sm:$0xff]
        %847 = vmatprep.subr.mxu0 0.0
        %848 = vmatpush1.msra.mxu0 %v831
        %849 = vmatprep.subr.mxu0 0.0
        %850 = vmatpush1.msra.mxu0 %v832
        %851 = vmatprep.subr.mxu0 0.0
        %852 = vmatpush1.msra.mxu0 %v833
        %853 = vmatprep.subr.mxu0 0.0
        %854 = vmatpush1.msra.mxu0 %v834
        %855 = vmatprep.subr.mxu0 0.0
        %856 = vmatpush1.msra.mxu0 %v835
        %857 = vmatprep.subr.mxu0 0.0
        %858 = vmatpush1.msra.mxu0 %v836
        %859 = vmatprep.subr.mxu0 0.0
        %860 = vmatpush1.msra.mxu0 %v837
        %861 = vmatprep.subr.mxu0 0.0
        %862 = vmatpush1.msra.mxu0 %v838
        %863 = vmatprep.subr.mxu0 0.0
        %864 = vmatpush1.msra.mxu0 %v839
        %865 = vmatprep.subr.mxu0 0.0
        %866 = vmatpush1.msra.mxu0 %v840
        %867 = vmatprep.subr.mxu0 0.0
        %868 = vmatpush1.msra.mxu0 %v841
        %869 = vmatprep.subr.mxu0 0.0
        %870 = vmatpush1.msra.mxu0 %v842
        %871 = vmatprep.subr.mxu0 0.0
        %872 = vmatpush1.msra.mxu0 %v843
        %873 = vmatprep.subr.mxu0 0.0
        %874 = vmatpush1.msra.mxu0 %v844
        %875 = vmatprep.subr.mxu0 0.0
        %876 = vmatpush1.msra.mxu0 %v845
        %877 = vmatprep.subr.mxu0 0.0
        %878 = vmatpush1.msra.mxu0 %v846
        %879 = vmatprep.subr.mxu0 0.0
        %880 = vmatpush1.msra.mxu0 0.0
        %881 = vmatprep.subr.mxu0 0.0
        %882 = vmatpush1.msra.mxu0 0.0
        %883 = vmatprep.subr.mxu0 0.0
        %884 = vmatpush1.msra.mxu0 0.0
        %885 = vmatprep.subr.mxu0 0.0
        %886 = vmatpush1.msra.mxu0 0.0
        %887 = vmatprep.subr.mxu0 0.0
        %888 = vmatpush1.msra.mxu0 0.0
        %889 = vmatprep.subr.mxu0 0.0
        %890 = vmatpush1.msra.mxu0 0.0
        %891 = vmatprep.subr.mxu0 0.0
        %892 = vmatpush1.msra.mxu0 0.0
        %893 = vmatprep.subr.mxu0 0.0
        %894 = vmatpush1.msra.mxu0 0.0
        %895 = vmatprep.subr.mxu0 0.0
        %896 = vmatpush1.msra.mxu0 0.0
        %897 = vmatprep.subr.mxu0 0.0
        %898 = vmatpush1.msra.mxu0 0.0
        %899 = vmatprep.subr.mxu0 0.0
        %900 = vmatpush1.msra.mxu0 0.0
        %901 = vmatprep.subr.mxu0 0.0
        %902 = vmatpush1.msra.mxu0 0.0
        %903 = vmatprep.subr.mxu0 0.0
        %904 = vmatpush1.msra.mxu0 0.0
        %905 = vmatprep.subr.mxu0 0.0
        %906 = vmatpush1.msra.mxu0 0.0
        %907 = vmatprep.subr.mxu0 0.0
        %908 = vmatpush1.msra.mxu0 0.0
        %909 = vmatprep.subr.mxu0 0.0
        %910 = vmatpush1.msra.mxu0 0.0
        %911 = vmatprep.mubr.f32.mxu0 0.0
        %912 = vmatmul.mubr.f32.gmra.mrb[0].mxu0 %v828
        %v913 = vpop.f32.mrb[0].mxu0
        %v914 = vadd.f32 0.0, %v913
        %v915 = vpop.f32.mrb[0].mxu0
        %916 = vmatprep.mubr.f32.mxu0 0.0
        %917 = vmatmul.mubr.f32.gmra.mrb[0].mxu0 %v829
        %v918 = vpop.f32.mrb[0].mxu0
        %v919 = vadd.f32 0.0, %v918
        %v920 = vpop.f32.mrb[0].mxu0
        %921 = vdwg.mxu0
        %v922 = vadd.f32 %v820, %v914
        %v923 = vadd.f32 %v825, %v919
        %v924 = vld [vmem:[%s4] sm:$0x1]
        %v926 = vlaneseq
        %v927 = vshrl.u32 %v926, 7
        %v928 = vsub.s32 0, %v927
        %v929 = vrot.slane %v924, %v928
        %v931 = vadd.f32 %v922, %v929
        %v932 = vadd.f32 %v923, %v929
        %v933 = vmax.f32 %v931, 0.0
        %v934 = vmax.f32 %v932, 0.0
        %v935 = vld [vmem:[#allocation10] sm:$0xff]
        %v936 = vld [vmem:[#allocation10 + $0x8] sm:$0xff]
        %v937 = vld [vmem:[#allocation10 + $0x10] sm:$0xff]
        %v938 = vld [vmem:[#allocation10 + $0x18] sm:$0xff]
        %v939 = vld [vmem:[#allocation10 + $0x20] sm:$0xff]
        %v940 = vld [vmem:[#allocation10 + $0x28] sm:$0xff]
        %v941 = vld [vmem:[#allocation10 + $0x30] sm:$0xff]
        %v942 = vld [vmem:[#allocation10 + $0x38] sm:$0xff]
        %v943 = vld [vmem:[#allocation10 + $0x40] sm:$0xff]
        %v944 = vld [vmem:[#allocation10 + $0x48] sm:$0xff]
        %v945 = vld [vmem:[#allocation10 + $0x50] sm:$0xff]
        %v946 = vld [vmem:[#allocation10 + $0x58] sm:$0xff]
        %v947 = vld [vmem:[#allocation10 + $0x60] sm:$0xff]
        %v948 = vld [vmem:[#allocation10 + $0x68] sm:$0xff]
        %v949 = vld [vmem:[#allocation10 + $0x70] sm:$0xff]
        %v950 = vld [vmem:[#allocation10 + $0x78] sm:$0xff]
        %v951 = vld [vmem:[%s6] sm:$0x1]
        %v953 = vlaneseq
        %v954 = vshrl.u32 %v953, 7
        %v955 = vsub.s32 0, %v954
        %v956 = vrot.slane %v951, %v955
        %958 = vmatprep.subr.mxu0 0.0
        %959 = vmatpush1.msra.mxu0 %v935
        %960 = vmatprep.subr.mxu0 0.0
        %961 = vmatpush1.msra.mxu0 %v936
        %962 = vmatprep.subr.mxu0 0.0
        %963 = vmatpush1.msra.mxu0 %v937
        %964 = vmatprep.subr.mxu0 0.0
        %965 = vmatpush1.msra.mxu0 %v938
        %966 = vmatprep.subr.mxu0 0.0
        %967 = vmatpush1.msra.mxu0 %v939
        %968 = vmatprep.subr.mxu0 0.0
        %969 = vmatpush1.msra.mxu0 %v940
        %970 = vmatprep.subr.mxu0 0.0
        %971 = vmatpush1.msra.mxu0 %v941
        %972 = vmatprep.subr.mxu0 0.0
        %973 = vmatpush1.msra.mxu0 %v942
        %974 = vmatprep.subr.mxu0 0.0
        %975 = vmatpush1.msra.mxu0 %v943
        %976 = vmatprep.subr.mxu0 0.0
        %977 = vmatpush1.msra.mxu0 %v944
        %978 = vmatprep.subr.mxu0 0.0
        %979 = vmatpush1.msra.mxu0 %v945
        %980 = vmatprep.subr.mxu0 0.0
        %981 = vmatpush1.msra.mxu0 %v946
        %982 = vmatprep.subr.mxu0 0.0
        %983 = vmatpush1.msra.mxu0 %v947
        %984 = vmatprep.subr.mxu0 0.0
        %985 = vmatpush1.msra.mxu0 %v948
        %986 = vmatprep.subr.mxu0 0.0
        %987 = vmatpush1.msra.mxu0 %v949
        %988 = vmatprep.subr.mxu0 0.0
        %989 = vmatpush1.msra.mxu0 %v950
        %990 = vmatprep.subr.mxu0 0.0
        %991 = vmatpush1.msra.mxu0 0.0
        %992 = vmatprep.subr.mxu0 0.0
        %993 = vmatpush1.msra.mxu0 0.0
        %994 = vmatprep.subr.mxu0 0.0
        %995 = vmatpush1.msra.mxu0 0.0
        %996 = vmatprep.subr.mxu0 0.0
        %997 = vmatpush1.msra.mxu0 0.0
        %998 = vmatprep.subr.mxu0 0.0
        %999 = vmatpush1.msra.mxu0 0.0
        %1000 = vmatprep.subr.mxu0 0.0
        %1001 = vmatpush1.msra.mxu0 0.0
        %1002 = vmatprep.subr.mxu0 0.0
        %1003 = vmatpush1.msra.mxu0 0.0
        %1004 = vmatprep.subr.mxu0 0.0
        %1005 = vmatpush1.msra.mxu0 0.0
        %1006 = vmatprep.subr.mxu0 0.0
        %1007 = vmatpush1.msra.mxu0 0.0
        %1008 = vmatprep.subr.mxu0 0.0
        %1009 = vmatpush1.msra.mxu0 0.0
        %1010 = vmatprep.subr.mxu0 0.0
        %1011 = vmatpush1.msra.mxu0 0.0
        %1012 = vmatprep.subr.mxu0 0.0
        %1013 = vmatpush1.msra.mxu0 0.0
        %1014 = vmatprep.subr.mxu0 0.0
        %1015 = vmatpush1.msra.mxu0 0.0
        %1016 = vmatprep.subr.mxu0 0.0
        %1017 = vmatpush1.msra.mxu0 0.0
        %1018 = vmatprep.subr.mxu0 0.0
        %1019 = vmatpush1.msra.mxu0 0.0
        %1020 = vmatprep.subr.mxu0 0.0
        %1021 = vmatpush1.msra.mxu0 0.0
        %1022 = vmatprep.mubr.f32.mxu0 0.0
        %1023 = vmatmul.mubr.f32.gmra.mrb[0].mxu0 %v933
        %v1024 = vpop.f32.mrb[0].mxu0
        %v1025 = vadd.f32 %v956, %v1024
        %v1026 = vpop.f32.mrb[0].mxu0
        %1027 = vmatprep.mubr.f32.mxu0 0.0
        %1028 = vmatmul.mubr.f32.gmra.mrb[0].mxu0 %v934
        %v1029 = vpop.f32.mrb[0].mxu0
        %v1030 = vadd.f32 %v956, %v1029
        %v1031 = vpop.f32.mrb[0].mxu0
        %1032 = vdwg.mxu0
        %s1033 = scalar_lea.vmem [#allocation10], 128
        %v1034 = vld [vmem:[%s1033] sm:$0xff]
        %v1035 = vld [vmem:[%s1033 + $0x8] sm:$0xff]
        %v1036 = vld [vmem:[%s1033 + $0x10] sm:$0xff]
        %v1037 = vld [vmem:[%s1033 + $0x18] sm:$0xff]
        %v1038 = vld [vmem:[%s1033 + $0x20] sm:$0xff]
        %v1039 = vld [vmem:[%s1033 + $0x28] sm:$0xff]
        %v1040 = vld [vmem:[%s1033 + $0x30] sm:$0xff]
        %v1041 = vld [vmem:[%s1033 + $0x38] sm:$0xff]
        %v1042 = vld [vmem:[%s1033 + $0x40] sm:$0xff]
        %v1043 = vld [vmem:[%s1033 + $0x48] sm:$0xff]
        %v1044 = vld [vmem:[%s1033 + $0x50] sm:$0xff]
        %v1045 = vld [vmem:[%s1033 + $0x58] sm:$0xff]
        %v1046 = vld [vmem:[%s1033 + $0x60] sm:$0xff]
        %v1047 = vld [vmem:[%s1033 + $0x68] sm:$0xff]
        %v1048 = vld [vmem:[%s1033 + $0x70] sm:$0xff]
        %v1049 = vld [vmem:[%s1033 + $0x78] sm:$0xff]
        %1050 = vmatprep.subr.mxu0 0.0
        %1051 = vmatpush1.msra.mxu0 %v1034
        %1052 = vmatprep.subr.mxu0 0.0
        %1053 = vmatpush1.msra.mxu0 %v1035
        %1054 = vmatprep.subr.mxu0 0.0
        %1055 = vmatpush1.msra.mxu0 %v1036
        %1056 = vmatprep.subr.mxu0 0.0
        %1057 = vmatpush1.msra.mxu0 %v1037
        %1058 = vmatprep.subr.mxu0 0.0
        %1059 = vmatpush1.msra.mxu0 %v1038
        %1060 = vmatprep.subr.mxu0 0.0
        %1061 = vmatpush1.msra.mxu0 %v1039
        %1062 = vmatprep.subr.mxu0 0.0
        %1063 = vmatpush1.msra.mxu0 %v1040
        %1064 = vmatprep.subr.mxu0 0.0
        %1065 = vmatpush1.msra.mxu0 %v1041
        %1066 = vmatprep.subr.mxu0 0.0
        %1067 = vmatpush1.msra.mxu0 %v1042
        %1068 = vmatprep.subr.mxu0 0.0
        %1069 = vmatpush1.msra.mxu0 %v1043
        %1070 = vmatprep.subr.mxu0 0.0
        %1071 = vmatpush1.msra.mxu0 %v1044
        %1072 = vmatprep.subr.mxu0 0.0
        %1073 = vmatpush1.msra.mxu0 %v1045
        %1074 = vmatprep.subr.mxu0 0.0
        %1075 = vmatpush1.msra.mxu0 %v1046
        %1076 = vmatprep.subr.mxu0 0.0
        %1077 = vmatpush1.msra.mxu0 %v1047
        %1078 = vmatprep.subr.mxu0 0.0
        %1079 = vmatpush1.msra.mxu0 %v1048
        %1080 = vmatprep.subr.mxu0 0.0
        %1081 = vmatpush1.msra.mxu0 %v1049
        %1082 = vmatprep.subr.mxu0 0.0
        %1083 = vmatpush1.msra.mxu0 0.0
        %1084 = vmatprep.subr.mxu0 0.0
        %1085 = vmatpush1.msra.mxu0 0.0
        %1086 = vmatprep.subr.mxu0 0.0
        %1087 = vmatpush1.msra.mxu0 0.0
        %1088 = vmatprep.subr.mxu0 0.0
        %1089 = vmatpush1.msra.mxu0 0.0
        %1090 = vmatprep.subr.mxu0 0.0
        %1091 = vmatpush1.msra.mxu0 0.0
        %1092 = vmatprep.subr.mxu0 0.0
        %1093 = vmatpush1.msra.mxu0 0.0
        %1094 = vmatprep.subr.mxu0 0.0
        %1095 = vmatpush1.msra.mxu0 0.0
        %1096 = vmatprep.subr.mxu0 0.0
        %1097 = vmatpush1.msra.mxu0 0.0
        %1098 = vmatprep.subr.mxu0 0.0
        %1099 = vmatpush1.msra.mxu0 0.0
        %1100 = vmatprep.subr.mxu0 0.0
        %1101 = vmatpush1.msra.mxu0 0.0
        %1102 = vmatprep.subr.mxu0 0.0
        %1103 = vmatpush1.msra.mxu0 0.0
        %1104 = vmatprep.subr.mxu0 0.0
        %1105 = vmatpush1.msra.mxu0 0.0
        %1106 = vmatprep.subr.mxu0 0.0
        %1107 = vmatpush1.msra.mxu0 0.0
        %1108 = vmatprep.subr.mxu0 0.0
        %1109 = vmatpush1.msra.mxu0 0.0
        %1110 = vmatprep.subr.mxu0 0.0
        %1111 = vmatpush1.msra.mxu0 0.0
        %1112 = vmatprep.subr.mxu0 0.0
        %1113 = vmatpush1.msra.mxu0 0.0
        %1114 = vmatprep.mubr.f32.mxu0 0.0
        %1115 = vmatmul.mubr.f32.gmra.mrb[0].mxu0 %v933
        %v1116 = vpop.f32.mrb[0].mxu0
        %v1117 = vadd.f32 %v956, %v1116
        %v1118 = vpop.f32.mrb[0].mxu0
        %1119 = vmatprep.mubr.f32.mxu0 0.0
        %1120 = vmatmul.mubr.f32.gmra.mrb[0].mxu0 %v934
        %v1121 = vpop.f32.mrb[0].mxu0
        %v1122 = vadd.f32 %v956, %v1121
        %v1123 = vpop.f32.mrb[0].mxu0
        %1124 = vdwg.mxu0
        %v1129 = vcombine.low %v1025, %v1117
        %v1130 = vcombine.high %v1025, %v1117
        %v1131 = vcombine.low %v1030, %v1122
        %v1132 = vcombine.high %v1030, %v1122
        %v1138 = vunpack.c.l.s4 1935823168
        %v1139 = vunpack.c.0.s8 %v1138
        %v1140 = vlaneseq
        %v1141 = vshrl.u32 %v1140, 7
        %v1142 = vsub.s32 %v1139, %v1141
        %v1143 = vrot.slane %v1129, %v1142
        %v1145 = vunpack.c.l.s4 1935823168
        %v1146 = vunpack.c.0.s8 %v1145
        %v1147 = vlaneseq
        %v1148 = vshrl.u32 %v1147, 7
        %v1149 = vsub.s32 %v1146, %v1148
        %v1150 = vrot.slane %v1130, %v1149
        %v1152 = vunpack.c.l.s4 1935823168
        %v1153 = vunpack.c.0.s8 %v1152
        %v1154 = vlaneseq
        %v1155 = vshrl.u32 %v1154, 7
        %v1156 = vsub.s32 %v1153, %v1155
        %v1157 = vrot.slane %v1131, %v1156
        %v1159 = vunpack.c.l.s4 1935823168
        %v1160 = vunpack.c.0.s8 %v1159
        %v1161 = vlaneseq
        %v1162 = vshrl.u32 %v1161, 7
        %v1163 = vsub.s32 %v1160, %v1162
        %v1164 = vrot.slane %v1132, %v1163
        %1165 = vst [vmem:[%s340] sm:$0xff] %v1143
        %1166 = vst [vmem:[%s340 + $0x8] sm:$0xff] %v1150
        %1167 = vst [vmem:[%s340 + $0x10] sm:$0xff] %v1157
        %1168 = vst [vmem:[%s340 + $0x18] sm:$0xff] %v1164
        %s1169 = sand.u32 %s186, 1
        %s1170 = scalar_lea.sflag [#allocation6], %s1169
        %s1171 = sand.u32 %s186, 1
        %s1172 = smul.addr %s1171, 32
        %s1173 = scalar_lea.vmem [#allocation12], %s1172
        // Predicated region
        $region65: #{tpu_custom_call.1} parent=47 // pred_check
          %p1174 = pneg %p196
        $region66: #{tpu_custom_call.1} parent=47 // pred_check_branch
          %1176 = sbr.rel (%p1174) target = $region68
        $region67: #{tpu_custom_call.1} parent=47 // pred_region
          %s1178 = ssub.s32 512, 512
          %1179 = vsyncadd %s1170, %s1178
          %s1180 = smul.addr %s26, 4
          %s1181 = smul.addr %s1180, 128
          %s1182 = scalar_lea.hbm %s7, %s1181
          %s1183 = sshll.u32 %s1173, 4
          %s1184 = int_to_ptr.vmem [resolvable:$true] %s1183
          %1189 = dma.vmem_to_hbm [thread:$0]  %s1184, 512, %s1182, %s1170, 128, 128, 8
        $region68: #{tpu_custom_call.1} parent=47 // pred_fallthru
          _
      $region48: #{tpu_custom_call.1} parent=5 // pred_fallthru
        _
      %p1190 = scmp.le.s32.totalorder 2, %s21
      // Predicated region
      $region69: #{tpu_custom_call.1} parent=5 // pred_check
        %p1191 = pneg %p1190
      $region70: #{tpu_custom_call.1} parent=5 // pred_check_branch
        %1193 = sbr.rel (%p1191) target = $region72
      $region71: #{tpu_custom_call.1} parent=5 // pred_region
        %s1194 = ssub.s32 %s21, 2
        // Predicated region
        $region73: #{tpu_custom_call.1} parent=71 // pred_check
          %p1195 = pneg %p202
        $region74: #{tpu_custom_call.1} parent=71 // pred_check_branch
          %1197 = sbr.rel (%p1195) target = $region76
        $region75: #{tpu_custom_call.1} parent=71 // pred_region
          %s1198 = sand.u32 %s187, 1
          %s1199 = scalar_lea.sflag [#allocation6], %s1198
          %s1200 = sand.u32 %s187, 1
          %s1201 = smul.addr %s1200, 32
          %s1202 = scalar_lea.vmem [#allocation12], %s1201
          %1203 = dma.done %s1199, 512
        $region76: #{tpu_custom_call.1} parent=71 // pred_fallthru
          _
      $region72: #{tpu_custom_call.1} parent=5 // pred_fallthru
        _
    $region6: #{tpu_custom_call.1} parent=1 // loop_footer
      %s25 = sadd.s32 1, %s21
    $region7: #{tpu_custom_call.1} parent=1 // loop_footer_branch
      %20 = sbr.rel target = $region3
    $region8: #{tpu_custom_call.1} parent=1 // loop_exit
      _
    %1204 = vsyncpa [#allocation5], 1
    %s1205 = scalar_lea.sflag [#allocation5], 1
    %1206 = vsyncpa %s1205, 1
    %1207 = vsyncpa [#allocation8], 1
    %1208 = vsyncpa [#allocation11], 1
    %1209 = vsyncpa [#allocation6], 1
    %s1210 = scalar_lea.sflag [#allocation6], 1
    %1211 = vsyncpa %s1210, 1

</llo_original>
